<compile_context>
chip_gen: v6e
topology: v6e:2x2x1
jax: 0.10.0
libtpu: 0.0.40
codegen_flags: <defaults>
</compile_context>

<pallas_src>
import math
from functools import partial

import jax
import jax.numpy as jnp
from jax.experimental import pallas as pl
from jax.experimental.pallas import tpu as pltpu


def _sublane(dtype):
    """Sublane packing count for a dtype (second-to-last-dim alignment unit)."""
    return {4: 8, 2: 16, 1: 32}.get(jnp.dtype(dtype).itemsize, 8)


def _check_chunk_alignment(csize, dim, ndim, dtype, what):
    """Ensure the chunked extent keeps blocks (8,128)-legal and stores unmasked."""
    if dim == ndim - 1:
        assert csize % 128 == 0, (
            f"{what} chunk size {csize} along the last axis must be a multiple "
            f"of 128 lanes (lane-dense, unmasked stores)"
        )
    elif dim == ndim - 2:
        s = _sublane(dtype)
        assert csize % s == 0, (
            f"{what} chunk size {csize} along the second-to-last axis must be a "
            f"multiple of the sublane count {s} for dtype {jnp.dtype(dtype).name}"
        )
    # Chunking a leading (non-tiled) axis has no alignment constraint.


def _nbytes(shape, dtype):
    return math.prod(shape) * jnp.dtype(dtype).itemsize


def _vmem_budget_bytes(in_chunk_shape, in_dtype, out_chunk, params):
    """Scoped-VMEM budget: params (single-buffered) + double-buffered in/out
    chunks + generous slack for fn's intermediates, with ~25% headroom."""
    param_bytes = sum(_nbytes(p.shape, p.dtype) for p in params)      # Buffered(1)
    in_bytes = 2 * _nbytes(in_chunk_shape, in_dtype)                  # double buffer
    out_bytes = 2 * _nbytes(out_chunk.shape, out_chunk.dtype)         # double buffer
    scratch = 4 * max(_nbytes(in_chunk_shape, jnp.float32),
                      _nbytes(out_chunk.shape, jnp.float32))
    est = int(1.25 * (param_bytes + in_bytes + out_bytes + scratch))
    # Floor at 32 MiB (harmless, above every default scoped limit), cap at the
    # smallest physical VMEM across supported chips (64 MiB on v7x).
    return max(32 * 1024 * 1024, min(est, 64 * 1024 * 1024))


def chunk_apply(fn, x, *params, chunks, along_dim=-1):
    """Pallas implementation of Chunk.forward.

    fn:     JAX-traceable fn(x_chunk, *params) -> y_chunk, applied per chunk
            inside the kernel (must preserve rank).
    x:      input array, chunked along `along_dim` into `chunks` equal pieces.
    params: extra arrays (e.g. weights) passed whole to fn for every chunk.
    """
    if chunks == 1:
        # PyTorch fast path: no chunking at all.
        return fn(x, *params)

    ndim = x.ndim
    dim = along_dim % ndim
    size = x.shape[dim]
    # TODO(synk): torch.chunk allows a smaller final chunk; only even splits here.
    assert size % chunks == 0, "chunked dim must divide evenly into `chunks`"
    csize = size // chunks

    in_chunk_shape = tuple(csize if a == dim else s for a, s in enumerate(x.shape))

    # Shape/dtype of fn applied to one chunk (defines the output block).
    out_chunk = jax.eval_shape(
        fn,
        jax.ShapeDtypeStruct(in_chunk_shape, x.dtype),
        *(jax.ShapeDtypeStruct(p.shape, p.dtype) for p in params),
    )
    assert len(out_chunk.shape) == ndim, "fn must preserve rank for the concat"
    out_shape = tuple(
        out_chunk.shape[a] * (chunks if a == dim else 1) for a in range(ndim)
    )

    # Alignment guards (perf review): keep the chunked extent tile-legal so the
    # output is written with full-width, unmasked vector stores.
    _check_chunk_alignment(csize, dim, ndim, x.dtype, "input")
    _check_chunk_alignment(out_chunk.shape[dim], dim, ndim, out_chunk.dtype, "output")

    n_params = len(params)

    def kernel(x_ref, *rest):
        param_refs = rest[:n_params]
        o_ref = rest[n_params]
        y = fn(x_ref[...], *(r[...] for r in param_refs))
        o_ref[...] = y.astype(o_ref.dtype)

    def chunk_index_map(c):
        return tuple(c if a == dim else 0 for a in range(ndim))

    x_spec = pl.BlockSpec(in_chunk_shape, chunk_index_map)
    # Params: constant block index -> stay resident in VMEM across grid steps.
    # Buffered(1) disables double-buffering for them (fetched exactly once),
    # halving their VMEM footprint.
    # TODO(synk): for production-size weights that exceed VMEM (e.g. v7x 64 MiB),
    # params would need memory_space=pl.ANY plus an inner pltpu.emit_pipeline
    # over fn's contraction axes; not expressible generically for arbitrary fn.
    param_specs = [
        pl.BlockSpec(p.shape, lambda c, n=p.ndim: (0,) * n,
                     pipeline_mode=pl.Buffered(1))
        for p in params
    ]
    out_spec = pl.BlockSpec(out_chunk.shape, chunk_index_map)

    vmem_limit = _vmem_budget_bytes(in_chunk_shape, x.dtype, out_chunk, params)

    return pl.pallas_call(
        kernel,
        out_shape=jax.ShapeDtypeStruct(out_shape, out_chunk.dtype),
        grid=(chunks,),
        in_specs=[x_spec] + param_specs,
        out_specs=out_spec,
        compiler_params=pltpu.CompilerParams(
            # Chunks are independent and write disjoint output slices.
            dimension_semantics=("parallel",),
            vmem_limit_bytes=vmem_limit,
        ),
    )(x, *params)


class Chunk:
    """JAX/Pallas port of the PyTorch Chunk module (forward only)."""

    def __init__(self, chunks, fn, along_dim=-1):
        self.dim = along_dim
        self.chunks = chunks
        self.fn = fn  # JAX-traceable fn(x_chunk, *params, **kwargs) -> y_chunk

    def __call__(self, x, *params, **kwargs):
        fn = partial(self.fn, **kwargs) if kwargs else self.fn
        return chunk_apply(fn, x, *params, chunks=self.chunks, along_dim=self.dim)


# ---- demo fns: the canonical things Chunk wraps --------------------------------
def feed_forward(x, w1, b1, w2, b2):
    """Per-chunk GELU FFN on a 2D (M, K) block — no reshape, no relayout.

    x/w1/w2 are bf16 (native MXU rate); both dots accumulate in f32 via
    preferred_element_type; bias + gelu stay f32 (VPU/EUP) before the bf16 cast.
    """
    h = jnp.dot(x, w1, preferred_element_type=jnp.float32) + b1
    h = jax.nn.gelu(h)
    y = jnp.dot(h.astype(w2.dtype), w2, preferred_element_type=jnp.float32) + b2
    return y.astype(x.dtype)


def scaled_gelu(x, scale=1.0):
    """Elementwise fn for the along_dim=-1 (module default) path."""
    return (jax.nn.gelu(x.astype(jnp.float32)) * scale).astype(x.dtype)


if __name__ == "__main__":
    key = jax.random.PRNGKey(0)
    k_x, k_w1, k_b1, k_w2, k_b2, k_x2 = jax.random.split(key, 6)

    # Demo 1: chunk the rows of a (tokens, dim) activation through a GELU FFN.
    # csize = 1024/2 = 512 rows per chunk -> matmul M = 512 (fills the MXU on
    # v6e/v7x, >=128 on v5e); n_chunks = 2 matches the v7x TensorCore count.
    tokens, dim, d_ff = 1024, 128, 256
    n_chunks = 2

    x = jax.random.normal(k_x, (tokens, dim), dtype=jnp.bfloat16)
    w1 = (jax.random.normal(k_w1, (dim, d_ff), jnp.float32) * 0.05).astype(jnp.bfloat16)
    b1 = jax.random.normal(k_b1, (1, d_ff), jnp.float32) * 0.1
    w2 = (jax.random.normal(k_w2, (d_ff, dim), jnp.float32) * 0.05).astype(jnp.bfloat16)
    b2 = jax.random.normal(k_b2, (1, dim), jnp.float32) * 0.1

    module = Chunk(n_chunks, feed_forward, along_dim=-2)
    out = jax.block_until_ready(module(x, w1, b1, w2, b2))

    # Reference: literal translation of the PyTorch forward (chunk -> fn -> cat),
    # run at the same bf16-in / f32-accumulate precision as the kernel.
    ref = jnp.concatenate(
        [feed_forward(c, w1, b1, w2, b2) for c in jnp.split(x, n_chunks, axis=-2)],
        axis=-2,
    )
    assert out.shape == ref.shape == (tokens, dim)
    assert out.dtype == jnp.bfloat16
    assert jnp.allclose(out.astype(jnp.float32), ref.astype(jnp.float32),
                        atol=2e-2, rtol=2e-2)

    # Demo 2: chunking along the LAST axis (module default along_dim=-1) with an
    # elementwise fn and a kwarg; csize = 512/2 = 256 is a multiple of 128 lanes
    # so output stores stay unmasked.
    x2 = jax.random.normal(k_x2, (256, 512), dtype=jnp.float32)
    module2 = Chunk(2, scaled_gelu, along_dim=-1)
    out2 = jax.block_until_ready(module2(x2, scale=0.5))
    ref2 = jnp.concatenate(
        [scaled_gelu(c, scale=0.5) for c in jnp.split(x2, 2, axis=-1)], axis=-1
    )
    assert out2.shape == ref2.shape == (256, 512)
    assert jnp.allclose(out2, ref2, atol=1e-5, rtol=1e-5)

    # chunks == 1 fast path (pure fn, no pallas_call, no chunking overhead).
    out1 = jax.block_until_ready(
        Chunk(1, feed_forward, along_dim=-2)(x, w1, b1, w2, b2)
    )
    assert jnp.allclose(out1.astype(jnp.float32),
                        feed_forward(x, w1, b1, w2, b2).astype(jnp.float32),
                        atol=2e-2, rtol=2e-2)

    print("KERNEL_OK")
</pallas_src>

<mosaic_0001>
module attributes {stable_mosaic.version = 11 : i64} {
  func.func @kernel(%arg0: i32, %arg1: memref<512x128xbf16, #tpu.memory_space<vmem>>, %arg2: memref<128x256xbf16, #tpu.memory_space<vmem>>, %arg3: memref<1x256xf32, #tpu.memory_space<vmem>>, %arg4: memref<256x128xbf16, #tpu.memory_space<vmem>>, %arg5: memref<1x128xf32, #tpu.memory_space<vmem>>, %arg6: memref<512x128xbf16, #tpu.memory_space<vmem>>) attributes {dimension_semantics = [#tpu.dimension_semantics<parallel>], iteration_bounds = array<i64: 2>, scalar_prefetch = 0 : i64, scratch_operands = 0 : i64, tpu.core_type = #tpu.core_type<tc>, window_params = [{transform_indices = @transform_0, window_bounds = array<i64: 512, 128>}, {pipeline_mode = #tpu.pipeline_mode<synchronous>, transform_indices = @transform_1, window_bounds = array<i64: 128, 256>}, {pipeline_mode = #tpu.pipeline_mode<synchronous>, transform_indices = @transform_2, window_bounds = array<i64: 1, 256>}, {pipeline_mode = #tpu.pipeline_mode<synchronous>, transform_indices = @transform_3, window_bounds = array<i64: 256, 128>}, {pipeline_mode = #tpu.pipeline_mode<synchronous>, transform_indices = @transform_4, window_bounds = array<i64: 1, 128>}, {transform_indices = @transform_5, window_bounds = array<i64: 512, 128>}]} {
    %c0 = arith.constant 0 : index
    %c0_0 = arith.constant 0 : index
    %0 = vector.load %arg1[%c0, %c0_0] : memref<512x128xbf16, #tpu.memory_space<vmem>>, vector<512x128xbf16>
    %c0_1 = arith.constant 0 : index
    %c0_2 = arith.constant 0 : index
    %1 = vector.load %arg2[%c0_1, %c0_2] : memref<128x256xbf16, #tpu.memory_space<vmem>>, vector<128x256xbf16>
    %c0_3 = arith.constant 0 : index
    %c0_4 = arith.constant 0 : index
    %2 = vector.load %arg3[%c0_3, %c0_4] : memref<1x256xf32, #tpu.memory_space<vmem>>, vector<1x256xf32>
    %c0_5 = arith.constant 0 : index
    %c0_6 = arith.constant 0 : index
    %3 = vector.load %arg4[%c0_5, %c0_6] : memref<256x128xbf16, #tpu.memory_space<vmem>>, vector<256x128xbf16>
    %c0_7 = arith.constant 0 : index
    %c0_8 = arith.constant 0 : index
    %4 = vector.load %arg5[%c0_7, %c0_8] : memref<1x128xf32, #tpu.memory_space<vmem>>, vector<1x128xf32>
    %cst = arith.constant dense<0.000000e+00> : vector<512x256xf32>
    %5 = tpu.matmul %0, %1, %cst {dimension_numbers = #tpu.dot_dimension_numbers<[1], [0], [0], [1], [0, 0, 1, 1], [], []>} : vector<512x128xbf16>, vector<128x256xbf16>, vector<512x256xf32> -> vector<512x256xf32>
    %6 = vector.broadcast %2 : vector<1x256xf32> to vector<512x256xf32>
    %7 = arith.addf %5, %6 : vector<512x256xf32>
    %8 = arith.mulf %7, %7 : vector<512x256xf32>
    %9 = arith.mulf %7, %8 : vector<512x256xf32>
    %cst_9 = arith.constant 4.471500e-02 : f32
    %10 = vector.broadcast %cst_9 : f32 to vector<512x256xf32>
    %11 = arith.mulf %10, %9 : vector<512x256xf32>
    %12 = arith.addf %7, %11 : vector<512x256xf32>
    %cst_10 = arith.constant 0.797884583 : f32
    %13 = vector.broadcast %cst_10 : f32 to vector<512x256xf32>
    %14 = arith.mulf %13, %12 : vector<512x256xf32>
    %15 = math.tanh %14 : vector<512x256xf32>
    %cst_11 = arith.constant 1.000000e+00 : f32
    %16 = vector.broadcast %cst_11 : f32 to vector<512x256xf32>
    %17 = arith.addf %16, %15 : vector<512x256xf32>
    %cst_12 = arith.constant 5.000000e-01 : f32
    %18 = vector.broadcast %cst_12 : f32 to vector<512x256xf32>
    %19 = arith.mulf %18, %17 : vector<512x256xf32>
    %20 = arith.mulf %7, %19 : vector<512x256xf32>
    %21 = arith.truncf %20 : vector<512x256xf32> to vector<512x256xbf16>
    %cst_13 = arith.constant dense<0.000000e+00> : vector<512x128xf32>
    %22 = tpu.matmul %21, %3, %cst_13 {dimension_numbers = #tpu.dot_dimension_numbers<[1], [0], [0], [1], [0, 0, 1, 1], [], []>} : vector<512x256xbf16>, vector<256x128xbf16>, vector<512x128xf32> -> vector<512x128xf32>
    %23 = vector.broadcast %4 : vector<1x128xf32> to vector<512x128xf32>
    %24 = arith.addf %22, %23 : vector<512x128xf32>
    %25 = arith.truncf %24 : vector<512x128xf32> to vector<512x128xbf16>
    %c0_14 = arith.constant 0 : index
    %c0_15 = arith.constant 0 : index
    %26 = vector.load %arg6[%c0_14, %c0_15] : memref<512x128xbf16, #tpu.memory_space<vmem>>, vector<512x128xbf16>
    tpu.vector_store %arg6[%c0_14, %c0_15], %25 {strides = array<i32>} : memref<512x128xbf16, #tpu.memory_space<vmem>>, vector<512x128xbf16>,
    return
  }
  func.func @transform_0(%arg0: i32) -> (i32, i32) {
    %c0_i32 = arith.constant 0 : i32
    %c0_i32_0 = arith.constant 0 : i32
    return %arg0, %c0_i32 : i32, i32
  }
  func.func @transform_1(%arg0: i32) -> (i32, i32) {
    %c0_i32 = arith.constant 0 : i32
    %c0_i32_0 = arith.constant 0 : i32
    %c0_i32_1 = arith.constant 0 : i32
    return %c0_i32, %c0_i32_0 : i32, i32
  }
  func.func @transform_2(%arg0: i32) -> (i32, i32) {
    %c0_i32 = arith.constant 0 : i32
    %c0_i32_0 = arith.constant 0 : i32
    %c0_i32_1 = arith.constant 0 : i32
    return %c0_i32, %c0_i32_0 : i32, i32
  }
  func.func @transform_3(%arg0: i32) -> (i32, i32) {
    %c0_i32 = arith.constant 0 : i32
    %c0_i32_0 = arith.constant 0 : i32
    %c0_i32_1 = arith.constant 0 : i32
    return %c0_i32, %c0_i32_0 : i32, i32
  }
  func.func @transform_4(%arg0: i32) -> (i32, i32) {
    %c0_i32 = arith.constant 0 : i32
    %c0_i32_0 = arith.constant 0 : i32
    %c0_i32_1 = arith.constant 0 : i32
    return %c0_i32, %c0_i32_0 : i32, i32
  }
  func.func @transform_5(%arg0: i32) -> (i32, i32) {
    %c0_i32 = arith.constant 0 : i32
    %c0_i32_0 = arith.constant 0 : i32
    return %arg0, %c0_i32 : i32, i32
  }
}

</mosaic_0001>

<llo_original>
// kernel: tpu_custom_call.1
$region0: #{tpu_custom_call.1}
  #allocation0 [shape = 'u32[]', space=smem, size = 0x4, offset = 0x4, fixed_abs, tag = 'smem constant byte address 0x4 - core index']
  #allocation1 [shape = 'u32[144,128]{1,0:T(1,128)}', space=vmem, size = 0x12000, scoped, tag = 'internal scratch']
  %s0 = inlined_call_operand.hbm [shape: bf16[1024,128], index: 0, kind: input, shape index: {}]
  %s1 = inlined_call_operand.hbm [shape: bf16[128,256], index: 1, kind: input, shape index: {}]
  %s2 = inlined_call_operand.vmem [shape: f32[1,256], index: 2, kind: input, shape index: {}]
  %s3 = inlined_call_operand.hbm [shape: bf16[256,128], index: 3, kind: input, shape index: {}]
  %s4 = inlined_call_operand.vmem [shape: f32[1,128], index: 4, kind: input, shape index: {}]
  %s5 = inlined_call_operand.hbm [shape: bf16[1024,128], index: 5, kind: output, shape index: {}]
  %s6 = sld [smem:[#allocation0]]
  $region65: #{tpu_custom_call.1} parent=0
    _
  %s8 = ssub.s32 1, %s6
  %s9 = scalar_select 0, %s8, %s6
  $region1: #{tpu_custom_call.1} parent=0
    #allocation2 [shape = 'u8[262144]{0}', space=vmem, size = 0x40000, scoped, tag = 'input window, operand 0']
    #allocation3 [shape = 's32[2]{0}', space=sflag, size = 0x8, scoped, tag = 'scoped memory for tpu_custom_call.1']
    #allocation4 [shape = 's32[2]{0}', space=sflag, size = 0x8, scoped, tag = 'scoped memory for tpu_custom_call.1']
    #allocation5 [shape = 'u8[65536]{0}', space=vmem, size = 0x10000, scoped, tag = 'input window, operand 1, single buffered']
    #allocation6 [shape = 's32[1]{0}', space=sflag, size = 0x4, scoped, tag = 'scoped memory for tpu_custom_call.1']
    #allocation7 [shape = 'u8[65536]{0}', space=vmem, size = 0x10000, scoped, tag = 'input window, operand 3, single buffered']
    #allocation8 [shape = 'u8[262144]{0}', space=vmem, size = 0x40000, scoped, tag = 'output window, operand 0']
    %10 = vsyncpa [#allocation3], 0
    %s11 = scalar_lea.sflag [#allocation3], 1
    %12 = vsyncpa %s11, 0
    %13 = vsyncpa [#allocation6], 0
    %14 = vsyncpa [#allocation4], 0
    %s15 = scalar_lea.sflag [#allocation4], 1
    %16 = vsyncpa %s15, 0
    loop: start=0, step=1, limit=4
    $region2: #{tpu_custom_call.1} parent=1 // loop_pre_header
      _
    $region3: #{tpu_custom_call.1} parent=1 // loop_header
      %s18 = sphi 0, %s22
      %p19 = scmp.ge.s32.totalorder %s18, 4
      %s28 = sphi 0, %s30
      %s31 = sphi 0, %s28
      %s32 = sphi 0, %s31
      %s48 = sphi 0, %s32
      %s52 = sphi 0, %s52
      %s54 = sphi 0, %s52
      %s55 = sphi 0, %s54
      %s69 = sphi 0, %s55
      %s73 = sphi 0, %s73
      %s75 = sphi 0, %s73
      %s76 = sphi 0, %s75
      %s90 = sphi 0, %s76
      %s94 = sphi 0, %s94
      %s96 = sphi 0, %s94
      %s97 = sphi 0, %s96
      %s111 = sphi 0, %s97
      %s115 = sphi 0, %s115
      %s117 = sphi 0, %s115
      %s118 = sphi 0, %s117
      %s132 = sphi 0, %s118
      %s138 = sphi 0, %s140
      %s141 = sphi 0, %s138
      %s142 = sphi 0, %s141
      %s158 = sphi 0, %s142
    $region4: #{tpu_custom_call.1} parent=1 // loop_header_branch
      %21 = sbr.rel (%p19) target = $region8
    $region5: #{tpu_custom_call.1} parent=1 // loop_body
      %s23 = ssub.s32 %s18, 1
      %s24 = ssub.s32 %s18, 2
      %s25 = sadd.s32 %s18, 1
      %s26 = ssub.s32 %s18, %s25
      %p27 = scmp.eq.s32.totalorder %s26, 0
      %s29 = sadd.s32 %s28, 1
      %s30 = scalar_select %p27, %s28, %s29
      %p33 = pneg %p27
      %p34 = scmp.eq.s32.totalorder %s18, 1
      %p35 = por %p33, %p34
      %p36 = scmp.ne.s32.totalorder %s28, %s31
      %p37 = scmp.eq.s32.totalorder %s18, 0
      %p38 = por %p36, %p37
      %p39 = scmp.ne.s32.totalorder %s28, %s31
      %p40 = scmp.eq.s32.totalorder %s23, 1
      %p41 = por %p39, %p40
      %p42 = scmp.ne.s32.totalorder %s31, %s32
      %p43 = scmp.eq.s32.totalorder %s23, 0
      %p44 = por %p42, %p43
      %p45 = scmp.ne.s32.totalorder %s31, %s32
      %p46 = scmp.eq.s32.totalorder %s24, 1
      %p47 = por %p45, %p46
      %p49 = scmp.ne.s32.totalorder %s32, %s48
      %p50 = scmp.eq.s32.totalorder %s24, 0
      %p51 = por %p49, %p50
      %s53 = sadd.s32 %s52, 1
      %p56 = scmp.eq.s32.totalorder %s18, 1
      %p57 = scmp.ne.s32.totalorder %s52, %s54
      %p58 = scmp.eq.s32.totalorder %s18, 0
      %p59 = por %p57, %p58
      %p60 = scmp.ne.s32.totalorder %s52, %s54
      %p61 = scmp.eq.s32.totalorder %s23, 1
      %p62 = por %p60, %p61
      %p63 = scmp.ne.s32.totalorder %s54, %s55
      %p64 = scmp.eq.s32.totalorder %s23, 0
      %p65 = por %p63, %p64
      %p66 = scmp.ne.s32.totalorder %s54, %s55
      %p67 = scmp.eq.s32.totalorder %s24, 1
      %p68 = por %p66, %p67
      %p70 = scmp.ne.s32.totalorder %s55, %s69
      %p71 = scmp.eq.s32.totalorder %s24, 0
      %p72 = por %p70, %p71
      %s74 = sadd.s32 %s73, 1
      %p77 = scmp.eq.s32.totalorder %s18, 1
      %p78 = scmp.ne.s32.totalorder %s73, %s75
      %p79 = scmp.eq.s32.totalorder %s18, 0
      %p80 = por %p78, %p79
      %p81 = scmp.ne.s32.totalorder %s73, %s75
      %p82 = scmp.eq.s32.totalorder %s23, 1
      %p83 = por %p81, %p82
      %p84 = scmp.ne.s32.totalorder %s75, %s76
      %p85 = scmp.eq.s32.totalorder %s23, 0
      %p86 = por %p84, %p85
      %p87 = scmp.ne.s32.totalorder %s75, %s76
      %p88 = scmp.eq.s32.totalorder %s24, 1
      %p89 = por %p87, %p88
      %p91 = scmp.ne.s32.totalorder %s76, %s90
      %p92 = scmp.eq.s32.totalorder %s24, 0
      %p93 = por %p91, %p92
      %s95 = sadd.s32 %s94, 1
      %p98 = scmp.eq.s32.totalorder %s18, 1
      %p99 = scmp.ne.s32.totalorder %s94, %s96
      %p100 = scmp.eq.s32.totalorder %s18, 0
      %p101 = por %p99, %p100
      %p102 = scmp.ne.s32.totalorder %s94, %s96
      %p103 = scmp.eq.s32.totalorder %s23, 1
      %p104 = por %p102, %p103
      %p105 = scmp.ne.s32.totalorder %s96, %s97
      %p106 = scmp.eq.s32.totalorder %s23, 0
      %p107 = por %p105, %p106
      %p108 = scmp.ne.s32.totalorder %s96, %s97
      %p109 = scmp.eq.s32.totalorder %s24, 1
      %p110 = por %p108, %p109
      %p112 = scmp.ne.s32.totalorder %s97, %s111
      %p113 = scmp.eq.s32.totalorder %s24, 0
      %p114 = por %p112, %p113
      %s116 = sadd.s32 %s115, 1
      %p119 = scmp.eq.s32.totalorder %s18, 1
      %p120 = scmp.ne.s32.totalorder %s115, %s117
      %p121 = scmp.eq.s32.totalorder %s18, 0
      %p122 = por %p120, %p121
      %p123 = scmp.ne.s32.totalorder %s115, %s117
      %p124 = scmp.eq.s32.totalorder %s23, 1
      %p125 = por %p123, %p124
      %p126 = scmp.ne.s32.totalorder %s117, %s118
      %p127 = scmp.eq.s32.totalorder %s23, 0
      %p128 = por %p126, %p127
      %p129 = scmp.ne.s32.totalorder %s117, %s118
      %p130 = scmp.eq.s32.totalorder %s24, 1
      %p131 = por %p129, %p130
      %p133 = scmp.ne.s32.totalorder %s118, %s132
      %p134 = scmp.eq.s32.totalorder %s24, 0
      %p135 = por %p133, %p134
      %s136 = ssub.s32 %s18, %s25
      %p137 = scmp.eq.s32.totalorder %s136, 0
      %s139 = sadd.s32 %s138, 1
      %s140 = scalar_select %p137, %s138, %s139
      %p143 = pneg %p137
      %p144 = scmp.eq.s32.totalorder %s18, 1
      %p145 = por %p143, %p144
      %p146 = scmp.ne.s32.totalorder %s138, %s141
      %p147 = scmp.eq.s32.totalorder %s18, 0
      %p148 = por %p146, %p147
      %p149 = scmp.ne.s32.totalorder %s138, %s141
      %p150 = scmp.eq.s32.totalorder %s23, 1
      %p151 = por %p149, %p150
      %p152 = scmp.ne.s32.totalorder %s141, %s142
      %p153 = scmp.eq.s32.totalorder %s23, 0
      %p154 = por %p152, %p153
      %p155 = scmp.ne.s32.totalorder %s141, %s142
      %p156 = scmp.eq.s32.totalorder %s24, 1
      %p157 = por %p155, %p156
      %p159 = scmp.ne.s32.totalorder %s142, %s158
      %p160 = scmp.eq.s32.totalorder %s24, 0
      %p161 = por %p159, %p160
      %p162 = scmp.le.s32.totalorder 1, %s18
      %p163 = scmp.lt.s32.totalorder %s18, 3
      %p164 = pnand %p162, %p163
      %p165 = pneg %p164
      // Predicated region
      $region9: #{tpu_custom_call.1} parent=5 // pred_check
        _
      $region10: #{tpu_custom_call.1} parent=5 // pred_check_branch
        %167 = sbr.rel (%p164) target = $region12
      $region11: #{tpu_custom_call.1} parent=5 // pred_region
        %s168 = ssub.s32 %s18, 1
        // Predicated region
        $region13: #{tpu_custom_call.1} parent=11 // pred_check
          %p169 = pneg %p65
        $region14: #{tpu_custom_call.1} parent=11 // pred_check_branch
          %171 = sbr.rel (%p169) target = $region16
        $region15: #{tpu_custom_call.1} parent=11 // pred_region
          %s173 = ssub.s32 2048, 2048
          %174 = vsyncadd [#allocation6], %s173
          %s175 = sshll.u32 [#allocation5], 4
          %s176 = int_to_ptr.vmem [resolvable:$true] %s175
          %181 = dma.hbm_to_vmem [thread:$0]  %s1, 2048, %s176, [#allocation6], 128, 128, 8
        $region16: #{tpu_custom_call.1} parent=11 // pred_fallthru
          _
        // Predicated region
        $region17: #{tpu_custom_call.1} parent=11 // pred_check
          %p182 = pneg %p86
        $region18: #{tpu_custom_call.1} parent=11 // pred_check_branch
          %184 = sbr.rel (%p182) target = $region20
        $region19: #{tpu_custom_call.1} parent=11 // pred_region
          _
        $region20: #{tpu_custom_call.1} parent=11 // pred_fallthru
          _
        // Predicated region
        $region21: #{tpu_custom_call.1} parent=11 // pred_check
          %p185 = pneg %p107
        $region22: #{tpu_custom_call.1} parent=11 // pred_check_branch
          %187 = sbr.rel (%p185) target = $region24
        $region23: #{tpu_custom_call.1} parent=11 // pred_region
          %s189 = ssub.s32 2048, 2048
          %190 = vsyncadd [#allocation6], %s189
          %s191 = sshll.u32 [#allocation7], 4
          %s192 = int_to_ptr.vmem [resolvable:$true] %s191
          %197 = dma.hbm_to_vmem [thread:$0]  %s3, 2048, %s192, [#allocation6], 64, 64, 4
        $region24: #{tpu_custom_call.1} parent=11 // pred_fallthru
          _
        // Predicated region
        $region25: #{tpu_custom_call.1} parent=11 // pred_check
          %p198 = pneg %p128
        $region26: #{tpu_custom_call.1} parent=11 // pred_check_branch
          %200 = sbr.rel (%p198) target = $region28
        $region27: #{tpu_custom_call.1} parent=11 // pred_region
          _
        $region28: #{tpu_custom_call.1} parent=11 // pred_fallthru
          _
      $region12: #{tpu_custom_call.1} parent=5 // pred_fallthru
        _
      %p201 = scmp.lt.s32.totalorder %s18, 2
      // Predicated region
      $region29: #{tpu_custom_call.1} parent=5 // pred_check
        %p202 = pneg %p201
      $region30: #{tpu_custom_call.1} parent=5 // pred_check_branch
        %204 = sbr.rel (%p202) target = $region32
      $region31: #{tpu_custom_call.1} parent=5 // pred_region
        // Predicated region
        $region33: #{tpu_custom_call.1} parent=31 // pred_check
          %p205 = pneg %p38
        $region34: #{tpu_custom_call.1} parent=31 // pred_check_branch
          %207 = sbr.rel (%p205) target = $region36
        $region35: #{tpu_custom_call.1} parent=31 // pred_region
          %s208 = sand.u32 %s28, 1
          %s209 = scalar_lea.sflag [#allocation3], %s208
          %s210 = sand.u32 %s28, 1
          %s211 = smul.addr %s210, 256
          %s212 = scalar_lea.vmem [#allocation2], %s211
          %s213 = smul.u32 64, %s18
          %s215 = ssub.s32 4096, 4096
          %216 = vsyncadd %s209, %s215
          %s217 = smul.addr %s213, 64
          %s218 = scalar_lea.hbm %s0, %s217
          %s219 = sshll.u32 %s212, 4
          %s220 = int_to_ptr.vmem [resolvable:$true] %s219
          %225 = dma.hbm_to_vmem [thread:$0]  %s218, 4096, %s220, %s209, 64, 64, 4
        $region36: #{tpu_custom_call.1} parent=31 // pred_fallthru
          _
      $region32: #{tpu_custom_call.1} parent=5 // pred_fallthru
        _
      %p226 = scmp.le.s32.totalorder 1, %s18
      %p227 = scmp.lt.s32.totalorder %s18, 3
      %p228 = pnand %p226, %p227
      %p229 = pneg %p228
      // Predicated region
      $region37: #{tpu_custom_call.1} parent=5 // pred_check
        _
      $region38: #{tpu_custom_call.1} parent=5 // pred_check_branch
        %231 = sbr.rel (%p228) target = $region40
      $region39: #{tpu_custom_call.1} parent=5 // pred_region
        %s232 = ssub.s32 %s18, 1
        %s233 = sand.u32 %s31, 1
        %s234 = scalar_lea.sflag [#allocation3], %s233
        %s235 = sand.u32 %s31, 1
        %s236 = smul.addr %s235, 256
        %s237 = scalar_lea.vmem [#allocation2], %s236
        // Predicated region
        $region41: #{tpu_custom_call.1} parent=39 // pred_check
          %p238 = pneg %p44
        $region42: #{tpu_custom_call.1} parent=39 // pred_check_branch
          %240 = sbr.rel (%p238) target = $region44
        $region43: #{tpu_custom_call.1} parent=39 // pred_region
          %241 = dma.done %s234, 4096
        $region44: #{tpu_custom_call.1} parent=39 // pred_fallthru
          _
        // Predicated region
        $region45: #{tpu_custom_call.1} parent=39 // pred_check
          %p242 = pneg %p65
        $region46: #{tpu_custom_call.1} parent=39 // pred_check_branch
          %244 = sbr.rel (%p242) target = $region48
        $region47: #{tpu_custom_call.1} parent=39 // pred_region
          %245 = dma.done [#allocation6], 2048
        $region48: #{tpu_custom_call.1} parent=39 // pred_fallthru
          _
        // Predicated region
        $region49: #{tpu_custom_call.1} parent=39 // pred_check
          %p246 = pneg %p107
        $region50: #{tpu_custom_call.1} parent=39 // pred_check_branch
          %248 = sbr.rel (%p246) target = $region52
        $region51: #{tpu_custom_call.1} parent=39 // pred_region
          %249 = dma.done [#allocation6], 2048
        $region52: #{tpu_custom_call.1} parent=39 // pred_fallthru
          _
        %s250 = sand.u32 %s31, 1
        %s251 = scalar_lea.sflag [#allocation3], %s250
        %s252 = sand.u32 %s31, 1
        %s253 = smul.addr %s252, 256
        %s254 = scalar_lea.vmem [#allocation2], %s253
        %p255 = pneg %p44
        %p256 = pneg %p41
        %p257 = pneg %p65
        %p258 = pneg %p62
        %p259 = pneg %p86
        %p260 = pneg %p83
        %p261 = pneg %p107
        %p262 = pneg %p104
        %p263 = pneg %p128
        %p264 = pneg %p125
        %p265 = pneg %p154
        %p266 = pneg %p151
        %s267 = sand.u32 %s141, 1
        %s268 = scalar_lea.sflag [#allocation4], %s267
        %s269 = sand.u32 %s141, 1
        %s270 = smul.addr %s269, 256
        %s271 = scalar_lea.vmem [#allocation8], %s270
        %s272 = smul.u32 64, %s23
        %s273 = smul.u32 64, %s23
        %v275 = vld [vmem:[%s237] sm:$0xf]
        %v276 = vld [vmem:[%s237 + $0x4] sm:$0xf]
        %v277 = vld [vmem:[%s237 + $0x8] sm:$0xf]
        %v278 = vld [vmem:[%s237 + $0xc] sm:$0xf]
        %v279 = vld [vmem:[%s237 + $0x10] sm:$0xf]
        %v280 = vld [vmem:[%s237 + $0x14] sm:$0xf]
        %v281 = vld [vmem:[%s237 + $0x18] sm:$0xf]
        %v282 = vld [vmem:[%s237 + $0x1c] sm:$0xf]
        %v283 = vld [vmem:[%s237 + $0x20] sm:$0xf]
        %v284 = vld [vmem:[%s237 + $0x24] sm:$0xf]
        %v285 = vld [vmem:[%s237 + $0x28] sm:$0xf]
        %v286 = vld [vmem:[%s237 + $0x2c] sm:$0xf]
        %v287 = vld [vmem:[%s237 + $0x30] sm:$0xf]
        %v288 = vld [vmem:[%s237 + $0x34] sm:$0xf]
        %v289 = vld [vmem:[%s237 + $0x38] sm:$0xf]
        %v290 = vld [vmem:[%s237 + $0x3c] sm:$0xf]
        %v291 = vld [vmem:[%s237 + $0x40] sm:$0xf]
        %v292 = vld [vmem:[%s237 + $0x44] sm:$0xf]
        %v293 = vld [vmem:[%s237 + $0x48] sm:$0xf]
        %v294 = vld [vmem:[%s237 + $0x4c] sm:$0xf]
        %v295 = vld [vmem:[%s237 + $0x50] sm:$0xf]
        %v296 = vld [vmem:[%s237 + $0x54] sm:$0xf]
        %v297 = vld [vmem:[%s237 + $0x58] sm:$0xf]
        %v298 = vld [vmem:[%s237 + $0x5c] sm:$0xf]
        %v299 = vld [vmem:[%s237 + $0x60] sm:$0xf]
        %v300 = vld [vmem:[%s237 + $0x64] sm:$0xf]
        %v301 = vld [vmem:[%s237 + $0x68] sm:$0xf]
        %v302 = vld [vmem:[%s237 + $0x6c] sm:$0xf]
        %v303 = vld [vmem:[%s237 + $0x70] sm:$0xf]
        %v304 = vld [vmem:[%s237 + $0x74] sm:$0xf]
        %v305 = vld [vmem:[%s237 + $0x78] sm:$0xf]
        %v306 = vld [vmem:[%s237 + $0x7c] sm:$0xf]
        %v307 = vld [vmem:[%s237 + $0x80] sm:$0xf]
        %v308 = vld [vmem:[%s237 + $0x84] sm:$0xf]
        %v309 = vld [vmem:[%s237 + $0x88] sm:$0xf]
        %v310 = vld [vmem:[%s237 + $0x8c] sm:$0xf]
        %v311 = vld [vmem:[%s237 + $0x90] sm:$0xf]
        %v312 = vld [vmem:[%s237 + $0x94] sm:$0xf]
        %v313 = vld [vmem:[%s237 + $0x98] sm:$0xf]
        %v314 = vld [vmem:[%s237 + $0x9c] sm:$0xf]
        %v315 = vld [vmem:[%s237 + $0xa0] sm:$0xf]
        %v316 = vld [vmem:[%s237 + $0xa4] sm:$0xf]
        %v317 = vld [vmem:[%s237 + $0xa8] sm:$0xf]
        %v318 = vld [vmem:[%s237 + $0xac] sm:$0xf]
        %v319 = vld [vmem:[%s237 + $0xb0] sm:$0xf]
        %v320 = vld [vmem:[%s237 + $0xb4] sm:$0xf]
        %v321 = vld [vmem:[%s237 + $0xb8] sm:$0xf]
        %v322 = vld [vmem:[%s237 + $0xbc] sm:$0xf]
        %v323 = vld [vmem:[%s237 + $0xc0] sm:$0xf]
        %v324 = vld [vmem:[%s237 + $0xc4] sm:$0xf]
        %v325 = vld [vmem:[%s237 + $0xc8] sm:$0xf]
        %v326 = vld [vmem:[%s237 + $0xcc] sm:$0xf]
        %v327 = vld [vmem:[%s237 + $0xd0] sm:$0xf]
        %v328 = vld [vmem:[%s237 + $0xd4] sm:$0xf]
        %v329 = vld [vmem:[%s237 + $0xd8] sm:$0xf]
        %v330 = vld [vmem:[%s237 + $0xdc] sm:$0xf]
        %v331 = vld [vmem:[%s237 + $0xe0] sm:$0xf]
        %v332 = vld [vmem:[%s237 + $0xe4] sm:$0xf]
        %v333 = vld [vmem:[%s237 + $0xe8] sm:$0xf]
        %v334 = vld [vmem:[%s237 + $0xec] sm:$0xf]
        %v335 = vld [vmem:[%s237 + $0xf0] sm:$0xf]
        %v336 = vld [vmem:[%s237 + $0xf4] sm:$0xf]
        %v337 = vld [vmem:[%s237 + $0xf8] sm:$0xf]
        %v338 = vld [vmem:[%s237 + $0xfc] sm:$0xf]
        %v339 = vld [vmem:[#allocation5] sm:$0xff]
        %v340 = vld [vmem:[#allocation5 + $0x8] sm:$0xff]
        %v341 = vld [vmem:[#allocation5 + $0x10] sm:$0xff]
        %v342 = vld [vmem:[#allocation5 + $0x18] sm:$0xff]
        %v343 = vld [vmem:[#allocation5 + $0x20] sm:$0xff]
        %v344 = vld [vmem:[#allocation5 + $0x28] sm:$0xff]
        %v345 = vld [vmem:[#allocation5 + $0x30] sm:$0xff]
        %v346 = vld [vmem:[#allocation5 + $0x38] sm:$0xff]
        %v347 = vld [vmem:[#allocation5 + $0x40] sm:$0xff]
        %v348 = vld [vmem:[#allocation5 + $0x48] sm:$0xff]
        %v349 = vld [vmem:[#allocation5 + $0x50] sm:$0xff]
        %v350 = vld [vmem:[#allocation5 + $0x58] sm:$0xff]
        %v351 = vld [vmem:[#allocation5 + $0x60] sm:$0xff]
        %v352 = vld [vmem:[#allocation5 + $0x68] sm:$0xff]
        %v353 = vld [vmem:[#allocation5 + $0x70] sm:$0xff]
        %v354 = vld [vmem:[#allocation5 + $0x78] sm:$0xff]
        %v355 = vld [vmem:[%s2] sm:$0x3]
        %v356 = vld [vmem:[#allocation7] sm:$0xf]
        %v357 = vld [vmem:[#allocation7 + $0x4] sm:$0xf]
        %v358 = vld [vmem:[#allocation7 + $0x8] sm:$0xf]
        %v359 = vld [vmem:[#allocation7 + $0xc] sm:$0xf]
        %v360 = vld [vmem:[#allocation7 + $0x10] sm:$0xf]
        %v361 = vld [vmem:[#allocation7 + $0x14] sm:$0xf]
        %v362 = vld [vmem:[#allocation7 + $0x18] sm:$0xf]
        %v363 = vld [vmem:[#allocation7 + $0x1c] sm:$0xf]
        %v364 = vld [vmem:[#allocation7 + $0x20] sm:$0xf]
        %v365 = vld [vmem:[#allocation7 + $0x24] sm:$0xf]
        %v366 = vld [vmem:[#allocation7 + $0x28] sm:$0xf]
        %v367 = vld [vmem:[#allocation7 + $0x2c] sm:$0xf]
        %v368 = vld [vmem:[#allocation7 + $0x30] sm:$0xf]
        %v369 = vld [vmem:[#allocation7 + $0x34] sm:$0xf]
        %v370 = vld [vmem:[#allocation7 + $0x38] sm:$0xf]
        %v371 = vld [vmem:[#allocation7 + $0x3c] sm:$0xf]
        %v372 = vld [vmem:[#allocation7 + $0x40] sm:$0xf]
        %v373 = vld [vmem:[#allocation7 + $0x44] sm:$0xf]
        %v374 = vld [vmem:[#allocation7 + $0x48] sm:$0xf]
        %v375 = vld [vmem:[#allocation7 + $0x4c] sm:$0xf]
        %v376 = vld [vmem:[#allocation7 + $0x50] sm:$0xf]
        %v377 = vld [vmem:[#allocation7 + $0x54] sm:$0xf]
        %v378 = vld [vmem:[#allocation7 + $0x58] sm:$0xf]
        %v379 = vld [vmem:[#allocation7 + $0x5c] sm:$0xf]
        %v380 = vld [vmem:[#allocation7 + $0x60] sm:$0xf]
        %v381 = vld [vmem:[#allocation7 + $0x64] sm:$0xf]
        %v382 = vld [vmem:[#allocation7 + $0x68] sm:$0xf]
        %v383 = vld [vmem:[#allocation7 + $0x6c] sm:$0xf]
        %v384 = vld [vmem:[#allocation7 + $0x70] sm:$0xf]
        %v385 = vld [vmem:[#allocation7 + $0x74] sm:$0xf]
        %v386 = vld [vmem:[#allocation7 + $0x78] sm:$0xf]
        %v387 = vld [vmem:[#allocation7 + $0x7c] sm:$0xf]
        %v388 = vld [vmem:[%s4] sm:$0x1]
        %v390 = vlaneseq
        %v391 = vshrl.u32 %v390, 7
        %v392 = vsub.s32 0, %v391
        %v393 = vrot.slane %v355, %v392
        %v394 = vlaneseq
        %v395 = vshrl.u32 %v394, 7
        %v396 = vsub.s32 1, %v395
        %v397 = vrot.slane %v355, %v396
        %v464 = vunpack.c.l.b16 %v275
        %v465 = vunpack.c.l.b16 %v276
        %v466 = vunpack.c.l.b16 %v277
        %v467 = vunpack.c.l.b16 %v278
        %v468 = vunpack.c.l.b16 %v279
        %v469 = vunpack.c.l.b16 %v280
        %v470 = vunpack.c.l.b16 %v281
        %v471 = vunpack.c.l.b16 %v282
        %v472 = vunpack.c.l.b16 %v283
        %v473 = vunpack.c.l.b16 %v284
        %v474 = vunpack.c.l.b16 %v285
        %v475 = vunpack.c.l.b16 %v286
        %v476 = vunpack.c.l.b16 %v287
        %v477 = vunpack.c.l.b16 %v288
        %v478 = vunpack.c.l.b16 %v289
        %v479 = vunpack.c.l.b16 %v290
        %v480 = vunpack.c.l.b16 %v291
        %v481 = vunpack.c.l.b16 %v292
        %v482 = vunpack.c.l.b16 %v293
        %v483 = vunpack.c.l.b16 %v294
        %v484 = vunpack.c.l.b16 %v295
        %v485 = vunpack.c.l.b16 %v296
        %v486 = vunpack.c.l.b16 %v297
        %v487 = vunpack.c.l.b16 %v298
        %v488 = vunpack.c.l.b16 %v299
        %v489 = vunpack.c.l.b16 %v300
        %v490 = vunpack.c.l.b16 %v301
        %v491 = vunpack.c.l.b16 %v302
        %v492 = vunpack.c.l.b16 %v303
        %v493 = vunpack.c.l.b16 %v304
        %v494 = vunpack.c.l.b16 %v305
        %v495 = vunpack.c.l.b16 %v306
        %v496 = vunpack.c.l.b16 %v307
        %v497 = vunpack.c.l.b16 %v308
        %v498 = vunpack.c.l.b16 %v309
        %v499 = vunpack.c.l.b16 %v310
        %v500 = vunpack.c.l.b16 %v311
        %v501 = vunpack.c.l.b16 %v312
        %v502 = vunpack.c.l.b16 %v313
        %v503 = vunpack.c.l.b16 %v314
        %v504 = vunpack.c.l.b16 %v315
        %v505 = vunpack.c.l.b16 %v316
        %v506 = vunpack.c.l.b16 %v317
        %v507 = vunpack.c.l.b16 %v318
        %v508 = vunpack.c.l.b16 %v319
        %v509 = vunpack.c.l.b16 %v320
        %v510 = vunpack.c.l.b16 %v321
        %v511 = vunpack.c.l.b16 %v322
        %v512 = vunpack.c.l.b16 %v323
        %v513 = vunpack.c.l.b16 %v324
        %v514 = vunpack.c.l.b16 %v325
        %v515 = vunpack.c.l.b16 %v326
        %v516 = vunpack.c.l.b16 %v327
        %v517 = vunpack.c.l.b16 %v328
        %v518 = vunpack.c.l.b16 %v329
        %v519 = vunpack.c.l.b16 %v330
        %v520 = vunpack.c.l.b16 %v331
        %v521 = vunpack.c.l.b16 %v332
        %v522 = vunpack.c.l.b16 %v333
        %v523 = vunpack.c.l.b16 %v334
        %v524 = vunpack.c.l.b16 %v335
        %v525 = vunpack.c.l.b16 %v336
        %v526 = vunpack.c.l.b16 %v337
        %v527 = vunpack.c.l.b16 %v338
        %v528 = vpack.c.b16 %v465, %v464
        %v529 = vpack.c.b16 %v467, %v466
        %v530 = vpack.c.b16 %v469, %v468
        %v531 = vpack.c.b16 %v471, %v470
        %v532 = vpack.c.b16 %v473, %v472
        %v533 = vpack.c.b16 %v475, %v474
        %v534 = vpack.c.b16 %v477, %v476
        %v535 = vpack.c.b16 %v479, %v478
        %v536 = vpack.c.b16 %v481, %v480
        %v537 = vpack.c.b16 %v483, %v482
        %v538 = vpack.c.b16 %v485, %v484
        %v539 = vpack.c.b16 %v487, %v486
        %v540 = vpack.c.b16 %v489, %v488
        %v541 = vpack.c.b16 %v491, %v490
        %v542 = vpack.c.b16 %v493, %v492
        %v543 = vpack.c.b16 %v495, %v494
        %v544 = vpack.c.b16 %v497, %v496
        %v545 = vpack.c.b16 %v499, %v498
        %v546 = vpack.c.b16 %v501, %v500
        %v547 = vpack.c.b16 %v503, %v502
        %v548 = vpack.c.b16 %v505, %v504
        %v549 = vpack.c.b16 %v507, %v506
        %v550 = vpack.c.b16 %v509, %v508
        %v551 = vpack.c.b16 %v511, %v510
        %v552 = vpack.c.b16 %v513, %v512
        %v553 = vpack.c.b16 %v515, %v514
        %v554 = vpack.c.b16 %v517, %v516
        %v555 = vpack.c.b16 %v519, %v518
        %v556 = vpack.c.b16 %v521, %v520
        %v557 = vpack.c.b16 %v523, %v522
        %v558 = vpack.c.b16 %v525, %v524
        %v559 = vpack.c.b16 %v527, %v526
        %v608 = vunpack.c.l.b16 %v339
        %v609 = vunpack.c.h.b16 %v339
        %v610 = vunpack.c.l.b16 %v340
        %v611 = vunpack.c.h.b16 %v340
        %v612 = vunpack.c.l.b16 %v341
        %v613 = vunpack.c.h.b16 %v341
        %v614 = vunpack.c.l.b16 %v342
        %v615 = vunpack.c.h.b16 %v342
        %v616 = vunpack.c.l.b16 %v343
        %v617 = vunpack.c.h.b16 %v343
        %v618 = vunpack.c.l.b16 %v344
        %v619 = vunpack.c.h.b16 %v344
        %v620 = vunpack.c.l.b16 %v345
        %v621 = vunpack.c.h.b16 %v345
        %v622 = vunpack.c.l.b16 %v346
        %v623 = vunpack.c.h.b16 %v346
        %v624 = vunpack.c.l.b16 %v347
        %v625 = vunpack.c.h.b16 %v347
        %v626 = vunpack.c.l.b16 %v348
        %v627 = vunpack.c.h.b16 %v348
        %v628 = vunpack.c.l.b16 %v349
        %v629 = vunpack.c.h.b16 %v349
        %v630 = vunpack.c.l.b16 %v350
        %v631 = vunpack.c.h.b16 %v350
        %v632 = vunpack.c.l.b16 %v351
        %v633 = vunpack.c.h.b16 %v351
        %v634 = vunpack.c.l.b16 %v352
        %v635 = vunpack.c.h.b16 %v352
        %v636 = vunpack.c.l.b16 %v353
        %v637 = vunpack.c.h.b16 %v353
        %v638 = vunpack.c.l.b16 %v354
        %v639 = vunpack.c.h.b16 %v354
        %v640 = vpack.c.b16 %v610, %v608
        %v641 = vpack.c.b16 %v611, %v609
        %v642 = vpack.c.b16 %v614, %v612
        %v643 = vpack.c.b16 %v615, %v613
        %v644 = vpack.c.b16 %v618, %v616
        %v645 = vpack.c.b16 %v619, %v617
        %v646 = vpack.c.b16 %v622, %v620
        %v647 = vpack.c.b16 %v623, %v621
        %v648 = vpack.c.b16 %v626, %v624
        %v649 = vpack.c.b16 %v627, %v625
        %v650 = vpack.c.b16 %v630, %v628
        %v651 = vpack.c.b16 %v631, %v629
        %v652 = vpack.c.b16 %v634, %v632
        %v653 = vpack.c.b16 %v635, %v633
        %v654 = vpack.c.b16 %v638, %v636
        %v655 = vpack.c.b16 %v639, %v637
        %672 = vmatprep.subr.bf16.mxu0 %v655
        %673 = vmatpush1.bf16.msra.mxu0 %v654
        %674 = vmatprep.subr.bf16.mxu0 %v653
        %675 = vmatpush1.bf16.msra.mxu0 %v652
        %676 = vmatprep.subr.bf16.mxu0 %v651
        %677 = vmatpush1.bf16.msra.mxu0 %v650
        %678 = vmatprep.subr.bf16.mxu0 %v649
        %679 = vmatpush1.bf16.msra.mxu0 %v648
        %680 = vmatprep.subr.bf16.mxu0 %v647
        %681 = vmatpush1.bf16.msra.mxu0 %v646
        %682 = vmatprep.subr.bf16.mxu0 %v645
        %683 = vmatpush1.bf16.msra.mxu0 %v644
        %684 = vmatprep.subr.bf16.mxu0 %v643
        %685 = vmatpush1.bf16.msra.mxu0 %v642
        %686 = vmatprep.subr.bf16.mxu0 %v641
        %687 = vmatpush1.bf16.msra.mxu0 %v640
        %688 = vmatprep.subr.bf16.mxu0 0
        %689 = vmatpush2.bf16.msra.mxu0 0
        %690 = vmatprep.subr.bf16.mxu0 0
        %691 = vmatpush2.bf16.msra.mxu0 0
        %692 = vmatprep.subr.bf16.mxu0 0
        %693 = vmatpush2.bf16.msra.mxu0 0
        %694 = vmatprep.subr.bf16.mxu0 0
        %695 = vmatpush2.bf16.msra.mxu0 0
        %696 = vmatprep.subr.bf16.mxu0 0
        %697 = vmatpush2.bf16.msra.mxu0 0
        %698 = vmatprep.subr.bf16.mxu0 0
        %699 = vmatpush2.bf16.msra.mxu0 0
        %700 = vmatprep.subr.bf16.mxu0 0
        %701 = vmatpush2.bf16.msra.mxu0 0
        %702 = vmatprep.subr.bf16.mxu0 0
        %703 = vmatpush2.bf16.msra.mxu0 0
        %704 = vmatprep.mubr.bf16.mxu0 0
        %705 = vmatmul.mubr.bf16.gmra.mxu0 %v528
        %v706 = vpop.f32.mrf.mxu0
        %v707 = vadd.f32 %v393, %v706
        %v708 = vpop.f32.mrf.mxu0
        %v709 = vadd.f32 %v397, %v708
        %v710 = vpop.f32.mrf.mxu0
        %v711 = vadd.f32 %v393, %v710
        %v712 = vpop.f32.mrf.mxu0
        %v713 = vadd.f32 %v397, %v712
        %714 = vmatprep.mubr.bf16.mxu0 0
        %715 = vmatmul.mubr.bf16.gmra.mxu0 %v529
        %v716 = vpop.f32.mrf.mxu0
        %v717 = vadd.f32 %v393, %v716
        %v718 = vpop.f32.mrf.mxu0
        %v719 = vadd.f32 %v397, %v718
        %v720 = vpop.f32.mrf.mxu0
        %v721 = vadd.f32 %v393, %v720
        %v722 = vpop.f32.mrf.mxu0
        %v723 = vadd.f32 %v397, %v722
        %724 = vmatprep.mubr.bf16.mxu0 0
        %725 = vmatmul.mubr.bf16.gmra.mxu0 %v530
        %v726 = vpop.f32.mrf.mxu0
        %v727 = vadd.f32 %v393, %v726
        %v728 = vpop.f32.mrf.mxu0
        %v729 = vadd.f32 %v397, %v728
        %v730 = vpop.f32.mrf.mxu0
        %v731 = vadd.f32 %v393, %v730
        %v732 = vpop.f32.mrf.mxu0
        %v733 = vadd.f32 %v397, %v732
        %734 = vmatprep.mubr.bf16.mxu0 0
        %735 = vmatmul.mubr.bf16.gmra.mxu0 %v531
        %v736 = vpop.f32.mrf.mxu0
        %v737 = vadd.f32 %v393, %v736
        %v738 = vpop.f32.mrf.mxu0
        %v739 = vadd.f32 %v397, %v738
        %v740 = vpop.f32.mrf.mxu0
        %v741 = vadd.f32 %v393, %v740
        %v742 = vpop.f32.mrf.mxu0
        %v743 = vadd.f32 %v397, %v742
        %744 = vmatprep.mubr.bf16.mxu0 0
        %745 = vmatmul.mubr.bf16.gmra.mxu0 %v532
        %v746 = vpop.f32.mrf.mxu0
        %v747 = vadd.f32 %v393, %v746
        %v748 = vpop.f32.mrf.mxu0
        %v749 = vadd.f32 %v397, %v748
        %v750 = vpop.f32.mrf.mxu0
        %v751 = vadd.f32 %v393, %v750
        %v752 = vpop.f32.mrf.mxu0
        %v753 = vadd.f32 %v397, %v752
        %754 = vmatprep.mubr.bf16.mxu0 0
        %755 = vmatmul.mubr.bf16.gmra.mxu0 %v533
        %v756 = vpop.f32.mrf.mxu0
        %v757 = vadd.f32 %v393, %v756
        %v758 = vpop.f32.mrf.mxu0
        %v759 = vadd.f32 %v397, %v758
        %v760 = vpop.f32.mrf.mxu0
        %v761 = vadd.f32 %v393, %v760
        %v762 = vpop.f32.mrf.mxu0
        %v763 = vadd.f32 %v397, %v762
        %764 = vmatprep.mubr.bf16.mxu0 0
        %765 = vmatmul.mubr.bf16.gmra.mxu0 %v534
        %v766 = vpop.f32.mrf.mxu0
        %v767 = vadd.f32 %v393, %v766
        %v768 = vpop.f32.mrf.mxu0
        %v769 = vadd.f32 %v397, %v768
        %v770 = vpop.f32.mrf.mxu0
        %v771 = vadd.f32 %v393, %v770
        %v772 = vpop.f32.mrf.mxu0
        %v773 = vadd.f32 %v397, %v772
        %774 = vmatprep.mubr.bf16.mxu0 0
        %775 = vmatmul.mubr.bf16.gmra.mxu0 %v535
        %v776 = vpop.f32.mrf.mxu0
        %v777 = vadd.f32 %v393, %v776
        %v778 = vpop.f32.mrf.mxu0
        %v779 = vadd.f32 %v397, %v778
        %v780 = vpop.f32.mrf.mxu0
        %v781 = vadd.f32 %v393, %v780
        %v782 = vpop.f32.mrf.mxu0
        %v783 = vadd.f32 %v397, %v782
        %784 = vmatprep.mubr.bf16.mxu0 0
        %785 = vmatmul.mubr.bf16.gmra.mxu0 %v536
        %v786 = vpop.f32.mrf.mxu0
        %v787 = vadd.f32 %v393, %v786
        %v788 = vpop.f32.mrf.mxu0
        %v789 = vadd.f32 %v397, %v788
        %v790 = vpop.f32.mrf.mxu0
        %v791 = vadd.f32 %v393, %v790
        %v792 = vpop.f32.mrf.mxu0
        %v793 = vadd.f32 %v397, %v792
        %794 = vmatprep.mubr.bf16.mxu0 0
        %795 = vmatmul.mubr.bf16.gmra.mxu0 %v537
        %v796 = vpop.f32.mrf.mxu0
        %v797 = vadd.f32 %v393, %v796
        %v798 = vpop.f32.mrf.mxu0
        %v799 = vadd.f32 %v397, %v798
        %v800 = vpop.f32.mrf.mxu0
        %v801 = vadd.f32 %v393, %v800
        %v802 = vpop.f32.mrf.mxu0
        %v803 = vadd.f32 %v397, %v802
        %804 = vmatprep.mubr.bf16.mxu0 0
        %805 = vmatmul.mubr.bf16.gmra.mxu0 %v538
        %v806 = vpop.f32.mrf.mxu0
        %v807 = vadd.f32 %v393, %v806
        %v808 = vpop.f32.mrf.mxu0
        %v809 = vadd.f32 %v397, %v808
        %v810 = vpop.f32.mrf.mxu0
        %v811 = vadd.f32 %v393, %v810
        %v812 = vpop.f32.mrf.mxu0
        %v813 = vadd.f32 %v397, %v812
        %814 = vmatprep.mubr.bf16.mxu0 0
        %815 = vmatmul.mubr.bf16.gmra.mxu0 %v539
        %v816 = vpop.f32.mrf.mxu0
        %v817 = vadd.f32 %v393, %v816
        %v818 = vpop.f32.mrf.mxu0
        %v819 = vadd.f32 %v397, %v818
        %v820 = vpop.f32.mrf.mxu0
        %v821 = vadd.f32 %v393, %v820
        %v822 = vpop.f32.mrf.mxu0
        %v823 = vadd.f32 %v397, %v822
        %824 = vmatprep.mubr.bf16.mxu0 0
        %825 = vmatmul.mubr.bf16.gmra.mxu0 %v540
        %v826 = vpop.f32.mrf.mxu0
        %v827 = vadd.f32 %v393, %v826
        %v828 = vpop.f32.mrf.mxu0
        %v829 = vadd.f32 %v397, %v828
        %v830 = vpop.f32.mrf.mxu0
        %v831 = vadd.f32 %v393, %v830
        %v832 = vpop.f32.mrf.mxu0
        %v833 = vadd.f32 %v397, %v832
        %834 = vmatprep.mubr.bf16.mxu0 0
        %835 = vmatmul.mubr.bf16.gmra.mxu0 %v541
        %v836 = vpop.f32.mrf.mxu0
        %v837 = vadd.f32 %v393, %v836
        %v838 = vpop.f32.mrf.mxu0
        %v839 = vadd.f32 %v397, %v838
        %v840 = vpop.f32.mrf.mxu0
        %v841 = vadd.f32 %v393, %v840
        %v842 = vpop.f32.mrf.mxu0
        %v843 = vadd.f32 %v397, %v842
        %844 = vmatprep.mubr.bf16.mxu0 0
        %845 = vmatmul.mubr.bf16.gmra.mxu0 %v542
        %v846 = vpop.f32.mrf.mxu0
        %v847 = vadd.f32 %v393, %v846
        %v848 = vpop.f32.mrf.mxu0
        %v849 = vadd.f32 %v397, %v848
        %v850 = vpop.f32.mrf.mxu0
        %v851 = vadd.f32 %v393, %v850
        %v852 = vpop.f32.mrf.mxu0
        %v853 = vadd.f32 %v397, %v852
        %854 = vmatprep.mubr.bf16.mxu0 0
        %855 = vmatmul.mubr.bf16.gmra.mxu0 %v543
        %v856 = vpop.f32.mrf.mxu0
        %v857 = vadd.f32 %v393, %v856
        %v858 = vpop.f32.mrf.mxu0
        %v859 = vadd.f32 %v397, %v858
        %v860 = vpop.f32.mrf.mxu0
        %v861 = vadd.f32 %v393, %v860
        %v862 = vpop.f32.mrf.mxu0
        %v863 = vadd.f32 %v397, %v862
        %864 = vmatprep.mubr.bf16.mxu0 0
        %865 = vmatmul.mubr.bf16.gmra.mxu0 %v544
        %v866 = vpop.f32.mrf.mxu0
        %v867 = vadd.f32 %v393, %v866
        %v868 = vpop.f32.mrf.mxu0
        %v869 = vadd.f32 %v397, %v868
        %v870 = vpop.f32.mrf.mxu0
        %v871 = vadd.f32 %v393, %v870
        %v872 = vpop.f32.mrf.mxu0
        %v873 = vadd.f32 %v397, %v872
        %874 = vmatprep.mubr.bf16.mxu0 0
        %875 = vmatmul.mubr.bf16.gmra.mxu0 %v545
        %v876 = vpop.f32.mrf.mxu0
        %v877 = vadd.f32 %v393, %v876
        %v878 = vpop.f32.mrf.mxu0
        %v879 = vadd.f32 %v397, %v878
        %v880 = vpop.f32.mrf.mxu0
        %v881 = vadd.f32 %v393, %v880
        %v882 = vpop.f32.mrf.mxu0
        %v883 = vadd.f32 %v397, %v882
        %884 = vmatprep.mubr.bf16.mxu0 0
        %885 = vmatmul.mubr.bf16.gmra.mxu0 %v546
        %v886 = vpop.f32.mrf.mxu0
        %v887 = vadd.f32 %v393, %v886
        %v888 = vpop.f32.mrf.mxu0
        %v889 = vadd.f32 %v397, %v888
        %v890 = vpop.f32.mrf.mxu0
        %v891 = vadd.f32 %v393, %v890
        %v892 = vpop.f32.mrf.mxu0
        %v893 = vadd.f32 %v397, %v892
        %894 = vmatprep.mubr.bf16.mxu0 0
        %895 = vmatmul.mubr.bf16.gmra.mxu0 %v547
        %v896 = vpop.f32.mrf.mxu0
        %v897 = vadd.f32 %v393, %v896
        %v898 = vpop.f32.mrf.mxu0
        %v899 = vadd.f32 %v397, %v898
        %v900 = vpop.f32.mrf.mxu0
        %v901 = vadd.f32 %v393, %v900
        %v902 = vpop.f32.mrf.mxu0
        %v903 = vadd.f32 %v397, %v902
        %904 = vmatprep.mubr.bf16.mxu0 0
        %905 = vmatmul.mubr.bf16.gmra.mxu0 %v548
        %v906 = vpop.f32.mrf.mxu0
        %v907 = vadd.f32 %v393, %v906
        %v908 = vpop.f32.mrf.mxu0
        %v909 = vadd.f32 %v397, %v908
        %v910 = vpop.f32.mrf.mxu0
        %v911 = vadd.f32 %v393, %v910
        %v912 = vpop.f32.mrf.mxu0
        %v913 = vadd.f32 %v397, %v912
        %914 = vmatprep.mubr.bf16.mxu0 0
        %915 = vmatmul.mubr.bf16.gmra.mxu0 %v549
        %v916 = vpop.f32.mrf.mxu0
        %v917 = vadd.f32 %v393, %v916
        %v918 = vpop.f32.mrf.mxu0
        %v919 = vadd.f32 %v397, %v918
        %v920 = vpop.f32.mrf.mxu0
        %v921 = vadd.f32 %v393, %v920
        %v922 = vpop.f32.mrf.mxu0
        %v923 = vadd.f32 %v397, %v922
        %924 = vmatprep.mubr.bf16.mxu0 0
        %925 = vmatmul.mubr.bf16.gmra.mxu0 %v550
        %v926 = vpop.f32.mrf.mxu0
        %v927 = vadd.f32 %v393, %v926
        %v928 = vpop.f32.mrf.mxu0
        %v929 = vadd.f32 %v397, %v928
        %v930 = vpop.f32.mrf.mxu0
        %v931 = vadd.f32 %v393, %v930
        %v932 = vpop.f32.mrf.mxu0
        %v933 = vadd.f32 %v397, %v932
        %934 = vmatprep.mubr.bf16.mxu0 0
        %935 = vmatmul.mubr.bf16.gmra.mxu0 %v551
        %v936 = vpop.f32.mrf.mxu0
        %v937 = vadd.f32 %v393, %v936
        %v938 = vpop.f32.mrf.mxu0
        %v939 = vadd.f32 %v397, %v938
        %v940 = vpop.f32.mrf.mxu0
        %v941 = vadd.f32 %v393, %v940
        %v942 = vpop.f32.mrf.mxu0
        %v943 = vadd.f32 %v397, %v942
        %944 = vmatprep.mubr.bf16.mxu0 0
        %945 = vmatmul.mubr.bf16.gmra.mxu0 %v552
        %v946 = vpop.f32.mrf.mxu0
        %v947 = vadd.f32 %v393, %v946
        %v948 = vpop.f32.mrf.mxu0
        %v949 = vadd.f32 %v397, %v948
        %v950 = vpop.f32.mrf.mxu0
        %v951 = vadd.f32 %v393, %v950
        %v952 = vpop.f32.mrf.mxu0
        %v953 = vadd.f32 %v397, %v952
        %954 = vmatprep.mubr.bf16.mxu0 0
        %955 = vmatmul.mubr.bf16.gmra.mxu0 %v553
        %v956 = vpop.f32.mrf.mxu0
        %v957 = vadd.f32 %v393, %v956
        %v958 = vpop.f32.mrf.mxu0
        %v959 = vadd.f32 %v397, %v958
        %v960 = vpop.f32.mrf.mxu0
        %v961 = vadd.f32 %v393, %v960
        %v962 = vpop.f32.mrf.mxu0
        %v963 = vadd.f32 %v397, %v962
        %964 = vmatprep.mubr.bf16.mxu0 0
        %965 = vmatmul.mubr.bf16.gmra.mxu0 %v554
        %v966 = vpop.f32.mrf.mxu0
        %v967 = vadd.f32 %v393, %v966
        %v968 = vpop.f32.mrf.mxu0
        %v969 = vadd.f32 %v397, %v968
        %v970 = vpop.f32.mrf.mxu0
        %v971 = vadd.f32 %v393, %v970
        %v972 = vpop.f32.mrf.mxu0
        %v973 = vadd.f32 %v397, %v972
        %974 = vmatprep.mubr.bf16.mxu0 0
        %975 = vmatmul.mubr.bf16.gmra.mxu0 %v555
        %v976 = vpop.f32.mrf.mxu0
        %v977 = vadd.f32 %v393, %v976
        %v978 = vpop.f32.mrf.mxu0
        %v979 = vadd.f32 %v397, %v978
        %v980 = vpop.f32.mrf.mxu0
        %v981 = vadd.f32 %v393, %v980
        %v982 = vpop.f32.mrf.mxu0
        %v983 = vadd.f32 %v397, %v982
        %984 = vmatprep.mubr.bf16.mxu0 0
        %985 = vmatmul.mubr.bf16.gmra.mxu0 %v556
        %v986 = vpop.f32.mrf.mxu0
        %v987 = vadd.f32 %v393, %v986
        %v988 = vpop.f32.mrf.mxu0
        %v989 = vadd.f32 %v397, %v988
        %v990 = vpop.f32.mrf.mxu0
        %v991 = vadd.f32 %v393, %v990
        %v992 = vpop.f32.mrf.mxu0
        %v993 = vadd.f32 %v397, %v992
        %994 = vmatprep.mubr.bf16.mxu0 0
        %995 = vmatmul.mubr.bf16.gmra.mxu0 %v557
        %v996 = vpop.f32.mrf.mxu0
        %v997 = vadd.f32 %v393, %v996
        %v998 = vpop.f32.mrf.mxu0
        %v999 = vadd.f32 %v397, %v998
        %v1000 = vpop.f32.mrf.mxu0
        %v1001 = vadd.f32 %v393, %v1000
        %v1002 = vpop.f32.mrf.mxu0
        %v1003 = vadd.f32 %v397, %v1002
        %1004 = vmatprep.mubr.bf16.mxu0 0
        %1005 = vmatmul.mubr.bf16.gmra.mxu0 %v558
        %v1006 = vpop.f32.mrf.mxu0
        %v1007 = vadd.f32 %v393, %v1006
        %v1008 = vpop.f32.mrf.mxu0
        %v1009 = vadd.f32 %v397, %v1008
        %v1010 = vpop.f32.mrf.mxu0
        %v1011 = vadd.f32 %v393, %v1010
        %v1012 = vpop.f32.mrf.mxu0
        %v1013 = vadd.f32 %v397, %v1012
        %1014 = vmatprep.mubr.bf16.mxu0 0
        %1015 = vmatmul.mubr.bf16.gmra.mxu0 %v559
        %v1016 = vpop.f32.mrf.mxu0
        %v1017 = vadd.f32 %v393, %v1016
        %v1018 = vpop.f32.mrf.mxu0
        %v1019 = vadd.f32 %v397, %v1018
        %v1020 = vpop.f32.mrf.mxu0
        %v1021 = vadd.f32 %v393, %v1020
        %v1022 = vpop.f32.mrf.mxu0
        %v1023 = vadd.f32 %v397, %v1022
        %1024 = vdwg.mxu0
        %v1025 = vmul.f32 %v707, %v707
        %v1026 = vmul.f32 %v709, %v709
        %v1027 = vmul.f32 %v711, %v711
        %v1028 = vmul.f32 %v713, %v713
        %v1029 = vmul.f32 %v717, %v717
        %v1030 = vmul.f32 %v719, %v719
        %v1031 = vmul.f32 %v721, %v721
        %v1032 = vmul.f32 %v723, %v723
        %v1033 = vmul.f32 %v727, %v727
        %v1034 = vmul.f32 %v729, %v729
        %v1035 = vmul.f32 %v731, %v731
        %v1036 = vmul.f32 %v733, %v733
        %v1037 = vmul.f32 %v737, %v737
        %v1038 = vmul.f32 %v739, %v739
        %v1039 = vmul.f32 %v741, %v741
        %v1040 = vmul.f32 %v743, %v743
        %v1041 = vmul.f32 %v747, %v747
        %v1042 = vmul.f32 %v749, %v749
        %v1043 = vmul.f32 %v751, %v751
        %v1044 = vmul.f32 %v753, %v753
        %v1045 = vmul.f32 %v757, %v757
        %v1046 = vmul.f32 %v759, %v759
        %v1047 = vmul.f32 %v761, %v761
        %v1048 = vmul.f32 %v763, %v763
        %v1049 = vmul.f32 %v767, %v767
        %v1050 = vmul.f32 %v769, %v769
        %v1051 = vmul.f32 %v771, %v771
        %v1052 = vmul.f32 %v773, %v773
        %v1053 = vmul.f32 %v777, %v777
        %v1054 = vmul.f32 %v779, %v779
        %v1055 = vmul.f32 %v781, %v781
        %v1056 = vmul.f32 %v783, %v783
        %v1057 = vmul.f32 %v787, %v787
        %v1058 = vmul.f32 %v789, %v789
        %v1059 = vmul.f32 %v791, %v791
        %v1060 = vmul.f32 %v793, %v793
        %v1061 = vmul.f32 %v797, %v797
        %v1062 = vmul.f32 %v799, %v799
        %v1063 = vmul.f32 %v801, %v801
        %v1064 = vmul.f32 %v803, %v803
        %v1065 = vmul.f32 %v807, %v807
        %v1066 = vmul.f32 %v809, %v809
        %v1067 = vmul.f32 %v811, %v811
        %v1068 = vmul.f32 %v813, %v813
        %v1069 = vmul.f32 %v817, %v817
        %v1070 = vmul.f32 %v819, %v819
        %v1071 = vmul.f32 %v821, %v821
        %v1072 = vmul.f32 %v823, %v823
        %v1073 = vmul.f32 %v827, %v827
        %v1074 = vmul.f32 %v829, %v829
        %v1075 = vmul.f32 %v831, %v831
        %v1076 = vmul.f32 %v833, %v833
        %v1077 = vmul.f32 %v837, %v837
        %v1078 = vmul.f32 %v839, %v839
        %v1079 = vmul.f32 %v841, %v841
        %v1080 = vmul.f32 %v843, %v843
        %v1081 = vmul.f32 %v847, %v847
        %v1082 = vmul.f32 %v849, %v849
        %v1083 = vmul.f32 %v851, %v851
        %v1084 = vmul.f32 %v853, %v853
        %v1085 = vmul.f32 %v857, %v857
        %v1086 = vmul.f32 %v859, %v859
        %v1087 = vmul.f32 %v861, %v861
        %v1088 = vmul.f32 %v863, %v863
        %v1089 = vmul.f32 %v867, %v867
        %v1090 = vmul.f32 %v869, %v869
        %v1091 = vmul.f32 %v871, %v871
        %v1092 = vmul.f32 %v873, %v873
        %v1093 = vmul.f32 %v877, %v877
        %v1094 = vmul.f32 %v879, %v879
        %v1095 = vmul.f32 %v881, %v881
        %v1096 = vmul.f32 %v883, %v883
        %v1097 = vmul.f32 %v887, %v887
        %v1098 = vmul.f32 %v889, %v889
        %v1099 = vmul.f32 %v891, %v891
        %v1100 = vmul.f32 %v893, %v893
        %v1101 = vmul.f32 %v897, %v897
        %v1102 = vmul.f32 %v899, %v899
        %v1103 = vmul.f32 %v901, %v901
        %v1104 = vmul.f32 %v903, %v903
        %v1105 = vmul.f32 %v907, %v907
        %v1106 = vmul.f32 %v909, %v909
        %v1107 = vmul.f32 %v911, %v911
        %v1108 = vmul.f32 %v913, %v913
        %v1109 = vmul.f32 %v917, %v917
        %v1110 = vmul.f32 %v919, %v919
        %v1111 = vmul.f32 %v921, %v921
        %v1112 = vmul.f32 %v923, %v923
        %v1113 = vmul.f32 %v927, %v927
        %v1114 = vmul.f32 %v929, %v929
        %v1115 = vmul.f32 %v931, %v931
        %v1116 = vmul.f32 %v933, %v933
        %v1117 = vmul.f32 %v937, %v937
        %v1118 = vmul.f32 %v939, %v939
        %v1119 = vmul.f32 %v941, %v941
        %v1120 = vmul.f32 %v943, %v943
        %v1121 = vmul.f32 %v947, %v947
        %v1122 = vmul.f32 %v949, %v949
        %v1123 = vmul.f32 %v951, %v951
        %v1124 = vmul.f32 %v953, %v953
        %v1125 = vmul.f32 %v957, %v957
        %v1126 = vmul.f32 %v959, %v959
        %v1127 = vmul.f32 %v961, %v961
        %v1128 = vmul.f32 %v963, %v963
        %v1129 = vmul.f32 %v967, %v967
        %v1130 = vmul.f32 %v969, %v969
        %v1131 = vmul.f32 %v971, %v971
        %v1132 = vmul.f32 %v973, %v973
        %v1133 = vmul.f32 %v977, %v977
        %v1134 = vmul.f32 %v979, %v979
        %v1135 = vmul.f32 %v981, %v981
        %v1136 = vmul.f32 %v983, %v983
        %v1137 = vmul.f32 %v987, %v987
        %v1138 = vmul.f32 %v989, %v989
        %v1139 = vmul.f32 %v991, %v991
        %v1140 = vmul.f32 %v993, %v993
        %v1141 = vmul.f32 %v997, %v997
        %v1142 = vmul.f32 %v999, %v999
        %v1143 = vmul.f32 %v1001, %v1001
        %v1144 = vmul.f32 %v1003, %v1003
        %v1145 = vmul.f32 %v1007, %v1007
        %v1146 = vmul.f32 %v1009, %v1009
        %v1147 = vmul.f32 %v1011, %v1011
        %v1148 = vmul.f32 %v1013, %v1013
        %v1149 = vmul.f32 %v1017, %v1017
        %v1150 = vmul.f32 %v1019, %v1019
        %v1151 = vmul.f32 %v1021, %v1021
        %v1152 = vmul.f32 %v1023, %v1023
        %v1153 = vmul.f32 %v707, %v1025
        %v1154 = vmul.f32 %v709, %v1026
        %v1155 = vmul.f32 %v711, %v1027
        %v1156 = vmul.f32 %v713, %v1028
        %v1157 = vmul.f32 %v717, %v1029
        %v1158 = vmul.f32 %v719, %v1030
        %v1159 = vmul.f32 %v721, %v1031
        %v1160 = vmul.f32 %v723, %v1032
        %v1161 = vmul.f32 %v727, %v1033
        %v1162 = vmul.f32 %v729, %v1034
        %v1163 = vmul.f32 %v731, %v1035
        %v1164 = vmul.f32 %v733, %v1036
        %v1165 = vmul.f32 %v737, %v1037
        %v1166 = vmul.f32 %v739, %v1038
        %v1167 = vmul.f32 %v741, %v1039
        %v1168 = vmul.f32 %v743, %v1040
        %v1169 = vmul.f32 %v747, %v1041
        %v1170 = vmul.f32 %v749, %v1042
        %v1171 = vmul.f32 %v751, %v1043
        %v1172 = vmul.f32 %v753, %v1044
        %v1173 = vmul.f32 %v757, %v1045
        %v1174 = vmul.f32 %v759, %v1046
        %v1175 = vmul.f32 %v761, %v1047
        %v1176 = vmul.f32 %v763, %v1048
        %v1177 = vmul.f32 %v767, %v1049
        %v1178 = vmul.f32 %v769, %v1050
        %v1179 = vmul.f32 %v771, %v1051
        %v1180 = vmul.f32 %v773, %v1052
        %v1181 = vmul.f32 %v777, %v1053
        %v1182 = vmul.f32 %v779, %v1054
        %v1183 = vmul.f32 %v781, %v1055
        %v1184 = vmul.f32 %v783, %v1056
        %v1185 = vmul.f32 %v787, %v1057
        %v1186 = vmul.f32 %v789, %v1058
        %v1187 = vmul.f32 %v791, %v1059
        %v1188 = vmul.f32 %v793, %v1060
        %v1189 = vmul.f32 %v797, %v1061
        %v1190 = vmul.f32 %v799, %v1062
        %v1191 = vmul.f32 %v801, %v1063
        %v1192 = vmul.f32 %v803, %v1064
        %v1193 = vmul.f32 %v807, %v1065
        %v1194 = vmul.f32 %v809, %v1066
        %v1195 = vmul.f32 %v811, %v1067
        %v1196 = vmul.f32 %v813, %v1068
        %v1197 = vmul.f32 %v817, %v1069
        %v1198 = vmul.f32 %v819, %v1070
        %v1199 = vmul.f32 %v821, %v1071
        %v1200 = vmul.f32 %v823, %v1072
        %v1201 = vmul.f32 %v827, %v1073
        %v1202 = vmul.f32 %v829, %v1074
        %v1203 = vmul.f32 %v831, %v1075
        %v1204 = vmul.f32 %v833, %v1076
        %v1205 = vmul.f32 %v837, %v1077
        %v1206 = vmul.f32 %v839, %v1078
        %v1207 = vmul.f32 %v841, %v1079
        %v1208 = vmul.f32 %v843, %v1080
        %v1209 = vmul.f32 %v847, %v1081
        %v1210 = vmul.f32 %v849, %v1082
        %v1211 = vmul.f32 %v851, %v1083
        %v1212 = vmul.f32 %v853, %v1084
        %v1213 = vmul.f32 %v857, %v1085
        %v1214 = vmul.f32 %v859, %v1086
        %v1215 = vmul.f32 %v861, %v1087
        %v1216 = vmul.f32 %v863, %v1088
        %v1217 = vmul.f32 %v867, %v1089
        %v1218 = vmul.f32 %v869, %v1090
        %v1219 = vmul.f32 %v871, %v1091
        %v1220 = vmul.f32 %v873, %v1092
        %v1221 = vmul.f32 %v877, %v1093
        %v1222 = vmul.f32 %v879, %v1094
        %v1223 = vmul.f32 %v881, %v1095
        %v1224 = vmul.f32 %v883, %v1096
        %v1225 = vmul.f32 %v887, %v1097
        %v1226 = vmul.f32 %v889, %v1098
        %v1227 = vmul.f32 %v891, %v1099
        %v1228 = vmul.f32 %v893, %v1100
        %v1229 = vmul.f32 %v897, %v1101
        %v1230 = vmul.f32 %v899, %v1102
        %v1231 = vmul.f32 %v901, %v1103
        %v1232 = vmul.f32 %v903, %v1104
        %v1233 = vmul.f32 %v907, %v1105
        %v1234 = vmul.f32 %v909, %v1106
        %v1235 = vmul.f32 %v911, %v1107
        %v1236 = vmul.f32 %v913, %v1108
        %v1237 = vmul.f32 %v917, %v1109
        %v1238 = vmul.f32 %v919, %v1110
        %v1239 = vmul.f32 %v921, %v1111
        %v1240 = vmul.f32 %v923, %v1112
        %v1241 = vmul.f32 %v927, %v1113
        %v1242 = vmul.f32 %v929, %v1114
        %v1243 = vmul.f32 %v931, %v1115
        %v1244 = vmul.f32 %v933, %v1116
        %v1245 = vmul.f32 %v937, %v1117
        %v1246 = vmul.f32 %v939, %v1118
        %v1247 = vmul.f32 %v941, %v1119
        %v1248 = vmul.f32 %v943, %v1120
        %v1249 = vmul.f32 %v947, %v1121
        %v1250 = vmul.f32 %v949, %v1122
        %v1251 = vmul.f32 %v951, %v1123
        %v1252 = vmul.f32 %v953, %v1124
        %v1253 = vmul.f32 %v957, %v1125
        %v1254 = vmul.f32 %v959, %v1126
        %v1255 = vmul.f32 %v961, %v1127
        %v1256 = vmul.f32 %v963, %v1128
        %v1257 = vmul.f32 %v967, %v1129
        %v1258 = vmul.f32 %v969, %v1130
        %v1259 = vmul.f32 %v971, %v1131
        %v1260 = vmul.f32 %v973, %v1132
        %v1261 = vmul.f32 %v977, %v1133
        %v1262 = vmul.f32 %v979, %v1134
        %v1263 = vmul.f32 %v981, %v1135
        %v1264 = vmul.f32 %v983, %v1136
        %v1265 = vmul.f32 %v987, %v1137
        %v1266 = vmul.f32 %v989, %v1138
        %v1267 = vmul.f32 %v991, %v1139
        %v1268 = vmul.f32 %v993, %v1140
        %v1269 = vmul.f32 %v997, %v1141
        %v1270 = vmul.f32 %v999, %v1142
        %v1271 = vmul.f32 %v1001, %v1143
        %v1272 = vmul.f32 %v1003, %v1144
        %v1273 = vmul.f32 %v1007, %v1145
        %v1274 = vmul.f32 %v1009, %v1146
        %v1275 = vmul.f32 %v1011, %v1147
        %v1276 = vmul.f32 %v1013, %v1148
        %v1277 = vmul.f32 %v1017, %v1149
        %v1278 = vmul.f32 %v1019, %v1150
        %v1279 = vmul.f32 %v1021, %v1151
        %v1280 = vmul.f32 %v1023, %v1152
        %v1281 = vmul.f32 %v1153, 0.044715
        %v1282 = vmul.f32 %v1154, 0.044715
        %v1283 = vmul.f32 %v1155, 0.044715
        %v1284 = vmul.f32 %v1156, 0.044715
        %v1285 = vmul.f32 %v1157, 0.044715
        %v1286 = vmul.f32 %v1158, 0.044715
        %v1287 = vmul.f32 %v1159, 0.044715
        %v1288 = vmul.f32 %v1160, 0.044715
        %v1289 = vmul.f32 %v1161, 0.044715
        %v1290 = vmul.f32 %v1162, 0.044715
        %v1291 = vmul.f32 %v1163, 0.044715
        %v1292 = vmul.f32 %v1164, 0.044715
        %v1293 = vmul.f32 %v1165, 0.044715
        %v1294 = vmul.f32 %v1166, 0.044715
        %v1295 = vmul.f32 %v1167, 0.044715
        %v1296 = vmul.f32 %v1168, 0.044715
        %v1297 = vmul.f32 %v1169, 0.044715
        %v1298 = vmul.f32 %v1170, 0.044715
        %v1299 = vmul.f32 %v1171, 0.044715
        %v1300 = vmul.f32 %v1172, 0.044715
        %v1301 = vmul.f32 %v1173, 0.044715
        %v1302 = vmul.f32 %v1174, 0.044715
        %v1303 = vmul.f32 %v1175, 0.044715
        %v1304 = vmul.f32 %v1176, 0.044715
        %v1305 = vmul.f32 %v1177, 0.044715
        %v1306 = vmul.f32 %v1178, 0.044715
        %v1307 = vmul.f32 %v1179, 0.044715
        %v1308 = vmul.f32 %v1180, 0.044715
        %v1309 = vmul.f32 %v1181, 0.044715
        %v1310 = vmul.f32 %v1182, 0.044715
        %v1311 = vmul.f32 %v1183, 0.044715
        %v1312 = vmul.f32 %v1184, 0.044715
        %v1313 = vmul.f32 %v1185, 0.044715
        %v1314 = vmul.f32 %v1186, 0.044715
        %v1315 = vmul.f32 %v1187, 0.044715
        %v1316 = vmul.f32 %v1188, 0.044715
        %v1317 = vmul.f32 %v1189, 0.044715
        %v1318 = vmul.f32 %v1190, 0.044715
        %v1319 = vmul.f32 %v1191, 0.044715
        %v1320 = vmul.f32 %v1192, 0.044715
        %v1321 = vmul.f32 %v1193, 0.044715
        %v1322 = vmul.f32 %v1194, 0.044715
        %v1323 = vmul.f32 %v1195, 0.044715
        %v1324 = vmul.f32 %v1196, 0.044715
        %v1325 = vmul.f32 %v1197, 0.044715
        %v1326 = vmul.f32 %v1198, 0.044715
        %v1327 = vmul.f32 %v1199, 0.044715
        %v1328 = vmul.f32 %v1200, 0.044715
        %v1329 = vmul.f32 %v1201, 0.044715
        %v1330 = vmul.f32 %v1202, 0.044715
        %v1331 = vmul.f32 %v1203, 0.044715
        %v1332 = vmul.f32 %v1204, 0.044715
        %v1333 = vmul.f32 %v1205, 0.044715
        %v1334 = vmul.f32 %v1206, 0.044715
        %v1335 = vmul.f32 %v1207, 0.044715
        %v1336 = vmul.f32 %v1208, 0.044715
        %v1337 = vmul.f32 %v1209, 0.044715
        %v1338 = vmul.f32 %v1210, 0.044715
        %v1339 = vmul.f32 %v1211, 0.044715
        %v1340 = vmul.f32 %v1212, 0.044715
        %v1341 = vmul.f32 %v1213, 0.044715
        %v1342 = vmul.f32 %v1214, 0.044715
        %v1343 = vmul.f32 %v1215, 0.044715
        %v1344 = vmul.f32 %v1216, 0.044715
        %v1345 = vmul.f32 %v1217, 0.044715
        %v1346 = vmul.f32 %v1218, 0.044715
        %v1347 = vmul.f32 %v1219, 0.044715
        %v1348 = vmul.f32 %v1220, 0.044715
        %v1349 = vmul.f32 %v1221, 0.044715
        %v1350 = vmul.f32 %v1222, 0.044715
        %v1351 = vmul.f32 %v1223, 0.044715
        %v1352 = vmul.f32 %v1224, 0.044715
        %v1353 = vmul.f32 %v1225, 0.044715
        %v1354 = vmul.f32 %v1226, 0.044715
        %v1355 = vmul.f32 %v1227, 0.044715
        %v1356 = vmul.f32 %v1228, 0.044715
        %v1357 = vmul.f32 %v1229, 0.044715
        %v1358 = vmul.f32 %v1230, 0.044715
        %v1359 = vmul.f32 %v1231, 0.044715
        %v1360 = vmul.f32 %v1232, 0.044715
        %v1361 = vmul.f32 %v1233, 0.044715
        %v1362 = vmul.f32 %v1234, 0.044715
        %v1363 = vmul.f32 %v1235, 0.044715
        %v1364 = vmul.f32 %v1236, 0.044715
        %v1365 = vmul.f32 %v1237, 0.044715
        %v1366 = vmul.f32 %v1238, 0.044715
        %v1367 = vmul.f32 %v1239, 0.044715
        %v1368 = vmul.f32 %v1240, 0.044715
        %v1369 = vmul.f32 %v1241, 0.044715
        %v1370 = vmul.f32 %v1242, 0.044715
        %v1371 = vmul.f32 %v1243, 0.044715
        %v1372 = vmul.f32 %v1244, 0.044715
        %v1373 = vmul.f32 %v1245, 0.044715
        %v1374 = vmul.f32 %v1246, 0.044715
        %v1375 = vmul.f32 %v1247, 0.044715
        %v1376 = vmul.f32 %v1248, 0.044715
        %v1377 = vmul.f32 %v1249, 0.044715
        %v1378 = vmul.f32 %v1250, 0.044715
        %v1379 = vmul.f32 %v1251, 0.044715
        %v1380 = vmul.f32 %v1252, 0.044715
        %v1381 = vmul.f32 %v1253, 0.044715
        %v1382 = vmul.f32 %v1254, 0.044715
        %v1383 = vmul.f32 %v1255, 0.044715
        %v1384 = vmul.f32 %v1256, 0.044715
        %v1385 = vmul.f32 %v1257, 0.044715
        %v1386 = vmul.f32 %v1258, 0.044715
        %v1387 = vmul.f32 %v1259, 0.044715
        %v1388 = vmul.f32 %v1260, 0.044715
        %v1389 = vmul.f32 %v1261, 0.044715
        %v1390 = vmul.f32 %v1262, 0.044715
        %v1391 = vmul.f32 %v1263, 0.044715
        %v1392 = vmul.f32 %v1264, 0.044715
        %v1393 = vmul.f32 %v1265, 0.044715
        %v1394 = vmul.f32 %v1266, 0.044715
        %v1395 = vmul.f32 %v1267, 0.044715
        %v1396 = vmul.f32 %v1268, 0.044715
        %v1397 = vmul.f32 %v1269, 0.044715
        %v1398 = vmul.f32 %v1270, 0.044715
        %v1399 = vmul.f32 %v1271, 0.044715
        %v1400 = vmul.f32 %v1272, 0.044715
        %v1401 = vmul.f32 %v1273, 0.044715
        %v1402 = vmul.f32 %v1274, 0.044715
        %v1403 = vmul.f32 %v1275, 0.044715
        %v1404 = vmul.f32 %v1276, 0.044715
        %v1405 = vmul.f32 %v1277, 0.044715
        %v1406 = vmul.f32 %v1278, 0.044715
        %v1407 = vmul.f32 %v1279, 0.044715
        %v1408 = vmul.f32 %v1280, 0.044715
        %v1409 = vadd.f32 %v707, %v1281
        %v1410 = vadd.f32 %v709, %v1282
        %v1411 = vadd.f32 %v711, %v1283
        %v1412 = vadd.f32 %v713, %v1284
        %v1413 = vadd.f32 %v717, %v1285
        %v1414 = vadd.f32 %v719, %v1286
        %v1415 = vadd.f32 %v721, %v1287
        %v1416 = vadd.f32 %v723, %v1288
        %v1417 = vadd.f32 %v727, %v1289
        %v1418 = vadd.f32 %v729, %v1290
        %v1419 = vadd.f32 %v731, %v1291
        %v1420 = vadd.f32 %v733, %v1292
        %v1421 = vadd.f32 %v737, %v1293
        %v1422 = vadd.f32 %v739, %v1294
        %v1423 = vadd.f32 %v741, %v1295
        %v1424 = vadd.f32 %v743, %v1296
        %v1425 = vadd.f32 %v747, %v1297
        %v1426 = vadd.f32 %v749, %v1298
        %v1427 = vadd.f32 %v751, %v1299
        %v1428 = vadd.f32 %v753, %v1300
        %v1429 = vadd.f32 %v757, %v1301
        %v1430 = vadd.f32 %v759, %v1302
        %v1431 = vadd.f32 %v761, %v1303
        %v1432 = vadd.f32 %v763, %v1304
        %v1433 = vadd.f32 %v767, %v1305
        %v1434 = vadd.f32 %v769, %v1306
        %v1435 = vadd.f32 %v771, %v1307
        %v1436 = vadd.f32 %v773, %v1308
        %v1437 = vadd.f32 %v777, %v1309
        %v1438 = vadd.f32 %v779, %v1310
        %v1439 = vadd.f32 %v781, %v1311
        %v1440 = vadd.f32 %v783, %v1312
        %v1441 = vadd.f32 %v787, %v1313
        %v1442 = vadd.f32 %v789, %v1314
        %v1443 = vadd.f32 %v791, %v1315
        %v1444 = vadd.f32 %v793, %v1316
        %v1445 = vadd.f32 %v797, %v1317
        %v1446 = vadd.f32 %v799, %v1318
        %v1447 = vadd.f32 %v801, %v1319
        %v1448 = vadd.f32 %v803, %v1320
        %v1449 = vadd.f32 %v807, %v1321
        %v1450 = vadd.f32 %v809, %v1322
        %v1451 = vadd.f32 %v811, %v1323
        %v1452 = vadd.f32 %v813, %v1324
        %v1453 = vadd.f32 %v817, %v1325
        %v1454 = vadd.f32 %v819, %v1326
        %v1455 = vadd.f32 %v821, %v1327
        %v1456 = vadd.f32 %v823, %v1328
        %v1457 = vadd.f32 %v827, %v1329
        %v1458 = vadd.f32 %v829, %v1330
        %v1459 = vadd.f32 %v831, %v1331
        %v1460 = vadd.f32 %v833, %v1332
        %v1461 = vadd.f32 %v837, %v1333
        %v1462 = vadd.f32 %v839, %v1334
        %v1463 = vadd.f32 %v841, %v1335
        %v1464 = vadd.f32 %v843, %v1336
        %v1465 = vadd.f32 %v847, %v1337
        %v1466 = vadd.f32 %v849, %v1338
        %v1467 = vadd.f32 %v851, %v1339
        %v1468 = vadd.f32 %v853, %v1340
        %v1469 = vadd.f32 %v857, %v1341
        %v1470 = vadd.f32 %v859, %v1342
        %v1471 = vadd.f32 %v861, %v1343
        %v1472 = vadd.f32 %v863, %v1344
        %v1473 = vadd.f32 %v867, %v1345
        %v1474 = vadd.f32 %v869, %v1346
        %v1475 = vadd.f32 %v871, %v1347
        %v1476 = vadd.f32 %v873, %v1348
        %v1477 = vadd.f32 %v877, %v1349
        %v1478 = vadd.f32 %v879, %v1350
        %v1479 = vadd.f32 %v881, %v1351
        %v1480 = vadd.f32 %v883, %v1352
        %v1481 = vadd.f32 %v887, %v1353
        %v1482 = vadd.f32 %v889, %v1354
        %v1483 = vadd.f32 %v891, %v1355
        %v1484 = vadd.f32 %v893, %v1356
        %v1485 = vadd.f32 %v897, %v1357
        %v1486 = vadd.f32 %v899, %v1358
        %v1487 = vadd.f32 %v901, %v1359
        %v1488 = vadd.f32 %v903, %v1360
        %v1489 = vadd.f32 %v907, %v1361
        %v1490 = vadd.f32 %v909, %v1362
        %v1491 = vadd.f32 %v911, %v1363
        %v1492 = vadd.f32 %v913, %v1364
        %v1493 = vadd.f32 %v917, %v1365
        %v1494 = vadd.f32 %v919, %v1366
        %v1495 = vadd.f32 %v921, %v1367
        %v1496 = vadd.f32 %v923, %v1368
        %v1497 = vadd.f32 %v927, %v1369
        %v1498 = vadd.f32 %v929, %v1370
        %v1499 = vadd.f32 %v931, %v1371
        %v1500 = vadd.f32 %v933, %v1372
        %v1501 = vadd.f32 %v937, %v1373
        %v1502 = vadd.f32 %v939, %v1374
        %v1503 = vadd.f32 %v941, %v1375
        %v1504 = vadd.f32 %v943, %v1376
        %v1505 = vadd.f32 %v947, %v1377
        %v1506 = vadd.f32 %v949, %v1378
        %v1507 = vadd.f32 %v951, %v1379
        %v1508 = vadd.f32 %v953, %v1380
        %v1509 = vadd.f32 %v957, %v1381
        %v1510 = vadd.f32 %v959, %v1382
        %v1511 = vadd.f32 %v961, %v1383
        %v1512 = vadd.f32 %v963, %v1384
        %v1513 = vadd.f32 %v967, %v1385
        %v1514 = vadd.f32 %v969, %v1386
        %v1515 = vadd.f32 %v971, %v1387
        %v1516 = vadd.f32 %v973, %v1388
        %v1517 = vadd.f32 %v977, %v1389
        %v1518 = vadd.f32 %v979, %v1390
        %v1519 = vadd.f32 %v981, %v1391
        %v1520 = vadd.f32 %v983, %v1392
        %v1521 = vadd.f32 %v987, %v1393
        %v1522 = vadd.f32 %v989, %v1394
        %v1523 = vadd.f32 %v991, %v1395
        %v1524 = vadd.f32 %v993, %v1396
        %v1525 = vadd.f32 %v997, %v1397
        %v1526 = vadd.f32 %v999, %v1398
        %v1527 = vadd.f32 %v1001, %v1399
        %v1528 = vadd.f32 %v1003, %v1400
        %v1529 = vadd.f32 %v1007, %v1401
        %v1530 = vadd.f32 %v1009, %v1402
        %v1531 = vadd.f32 %v1011, %v1403
        %v1532 = vadd.f32 %v1013, %v1404
        %v1533 = vadd.f32 %v1017, %v1405
        %v1534 = vadd.f32 %v1019, %v1406
        %v1535 = vadd.f32 %v1021, %v1407
        %v1536 = vadd.f32 %v1023, %v1408
        %v1537 = vmul.f32 %v1409, 0.7978846
        %v1538 = vmul.f32 %v1410, 0.7978846
        %v1539 = vmul.f32 %v1411, 0.7978846
        %v1540 = vmul.f32 %v1412, 0.7978846
        %v1541 = vmul.f32 %v1413, 0.7978846
        %v1542 = vmul.f32 %v1414, 0.7978846
        %v1543 = vmul.f32 %v1415, 0.7978846
        %v1544 = vmul.f32 %v1416, 0.7978846
        %v1545 = vmul.f32 %v1417, 0.7978846
        %v1546 = vmul.f32 %v1418, 0.7978846
        %v1547 = vmul.f32 %v1419, 0.7978846
        %v1548 = vmul.f32 %v1420, 0.7978846
        %v1549 = vmul.f32 %v1421, 0.7978846
        %v1550 = vmul.f32 %v1422, 0.7978846
        %v1551 = vmul.f32 %v1423, 0.7978846
        %v1552 = vmul.f32 %v1424, 0.7978846
        %v1553 = vmul.f32 %v1425, 0.7978846
        %v1554 = vmul.f32 %v1426, 0.7978846
        %v1555 = vmul.f32 %v1427, 0.7978846
        %v1556 = vmul.f32 %v1428, 0.7978846
        %v1557 = vmul.f32 %v1429, 0.7978846
        %v1558 = vmul.f32 %v1430, 0.7978846
        %v1559 = vmul.f32 %v1431, 0.7978846
        %v1560 = vmul.f32 %v1432, 0.7978846
        %v1561 = vmul.f32 %v1433, 0.7978846
        %v1562 = vmul.f32 %v1434, 0.7978846
        %v1563 = vmul.f32 %v1435, 0.7978846
        %v1564 = vmul.f32 %v1436, 0.7978846
        %v1565 = vmul.f32 %v1437, 0.7978846
        %v1566 = vmul.f32 %v1438, 0.7978846
        %v1567 = vmul.f32 %v1439, 0.7978846
        %v1568 = vmul.f32 %v1440, 0.7978846
        %v1569 = vmul.f32 %v1441, 0.7978846
        %v1570 = vmul.f32 %v1442, 0.7978846
        %v1571 = vmul.f32 %v1443, 0.7978846
        %v1572 = vmul.f32 %v1444, 0.7978846
        %v1573 = vmul.f32 %v1445, 0.7978846
        %v1574 = vmul.f32 %v1446, 0.7978846
        %v1575 = vmul.f32 %v1447, 0.7978846
        %v1576 = vmul.f32 %v1448, 0.7978846
        %v1577 = vmul.f32 %v1449, 0.7978846
        %v1578 = vmul.f32 %v1450, 0.7978846
        %v1579 = vmul.f32 %v1451, 0.7978846
        %v1580 = vmul.f32 %v1452, 0.7978846
        %v1581 = vmul.f32 %v1453, 0.7978846
        %v1582 = vmul.f32 %v1454, 0.7978846
        %v1583 = vmul.f32 %v1455, 0.7978846
        %v1584 = vmul.f32 %v1456, 0.7978846
        %v1585 = vmul.f32 %v1457, 0.7978846
        %v1586 = vmul.f32 %v1458, 0.7978846
        %v1587 = vmul.f32 %v1459, 0.7978846
        %v1588 = vmul.f32 %v1460, 0.7978846
        %v1589 = vmul.f32 %v1461, 0.7978846
        %v1590 = vmul.f32 %v1462, 0.7978846
        %v1591 = vmul.f32 %v1463, 0.7978846
        %v1592 = vmul.f32 %v1464, 0.7978846
        %v1593 = vmul.f32 %v1465, 0.7978846
        %v1594 = vmul.f32 %v1466, 0.7978846
        %v1595 = vmul.f32 %v1467, 0.7978846
        %v1596 = vmul.f32 %v1468, 0.7978846
        %v1597 = vmul.f32 %v1469, 0.7978846
        %v1598 = vmul.f32 %v1470, 0.7978846
        %v1599 = vmul.f32 %v1471, 0.7978846
        %v1600 = vmul.f32 %v1472, 0.7978846
        %v1601 = vmul.f32 %v1473, 0.7978846
        %v1602 = vmul.f32 %v1474, 0.7978846
        %v1603 = vmul.f32 %v1475, 0.7978846
        %v1604 = vmul.f32 %v1476, 0.7978846
        %v1605 = vmul.f32 %v1477, 0.7978846
        %v1606 = vmul.f32 %v1478, 0.7978846
        %v1607 = vmul.f32 %v1479, 0.7978846
        %v1608 = vmul.f32 %v1480, 0.7978846
        %v1609 = vmul.f32 %v1481, 0.7978846
        %v1610 = vmul.f32 %v1482, 0.7978846
        %v1611 = vmul.f32 %v1483, 0.7978846
        %v1612 = vmul.f32 %v1484, 0.7978846
        %v1613 = vmul.f32 %v1485, 0.7978846
        %v1614 = vmul.f32 %v1486, 0.7978846
        %v1615 = vmul.f32 %v1487, 0.7978846
        %v1616 = vmul.f32 %v1488, 0.7978846
        %v1617 = vmul.f32 %v1489, 0.7978846
        %v1618 = vmul.f32 %v1490, 0.7978846
        %v1619 = vmul.f32 %v1491, 0.7978846
        %v1620 = vmul.f32 %v1492, 0.7978846
        %v1621 = vmul.f32 %v1493, 0.7978846
        %v1622 = vmul.f32 %v1494, 0.7978846
        %v1623 = vmul.f32 %v1495, 0.7978846
        %v1624 = vmul.f32 %v1496, 0.7978846
        %v1625 = vmul.f32 %v1497, 0.7978846
        %v1626 = vmul.f32 %v1498, 0.7978846
        %v1627 = vmul.f32 %v1499, 0.7978846
        %v1628 = vmul.f32 %v1500, 0.7978846
        %v1629 = vmul.f32 %v1501, 0.7978846
        %v1630 = vmul.f32 %v1502, 0.7978846
        %v1631 = vmul.f32 %v1503, 0.7978846
        %v1632 = vmul.f32 %v1504, 0.7978846
        %v1633 = vmul.f32 %v1505, 0.7978846
        %v1634 = vmul.f32 %v1506, 0.7978846
        %v1635 = vmul.f32 %v1507, 0.7978846
        %v1636 = vmul.f32 %v1508, 0.7978846
        %v1637 = vmul.f32 %v1509, 0.7978846
        %v1638 = vmul.f32 %v1510, 0.7978846
        %v1639 = vmul.f32 %v1511, 0.7978846
        %v1640 = vmul.f32 %v1512, 0.7978846
        %v1641 = vmul.f32 %v1513, 0.7978846
        %v1642 = vmul.f32 %v1514, 0.7978846
        %v1643 = vmul.f32 %v1515, 0.7978846
        %v1644 = vmul.f32 %v1516, 0.7978846
        %v1645 = vmul.f32 %v1517, 0.7978846
        %v1646 = vmul.f32 %v1518, 0.7978846
        %v1647 = vmul.f32 %v1519, 0.7978846
        %v1648 = vmul.f32 %v1520, 0.7978846
        %v1649 = vmul.f32 %v1521, 0.7978846
        %v1650 = vmul.f32 %v1522, 0.7978846
        %v1651 = vmul.f32 %v1523, 0.7978846
        %v1652 = vmul.f32 %v1524, 0.7978846
        %v1653 = vmul.f32 %v1525, 0.7978846
        %v1654 = vmul.f32 %v1526, 0.7978846
        %v1655 = vmul.f32 %v1527, 0.7978846
        %v1656 = vmul.f32 %v1528, 0.7978846
        %v1657 = vmul.f32 %v1529, 0.7978846
        %v1658 = vmul.f32 %v1530, 0.7978846
        %v1659 = vmul.f32 %v1531, 0.7978846
        %v1660 = vmul.f32 %v1532, 0.7978846
        %v1661 = vmul.f32 %v1533, 0.7978846
        %v1662 = vmul.f32 %v1534, 0.7978846
        %v1663 = vmul.f32 %v1535, 0.7978846
        %v1664 = vmul.f32 %v1536, 0.7978846
        %v1665 = vtanh.pop %v1537
        %v1666 = vtanh.pop %v1538
        %v1667 = vtanh.pop %v1539
        %v1668 = vtanh.pop %v1540
        %v1669 = vtanh.pop %v1541
        %v1670 = vtanh.pop %v1542
        %v1671 = vtanh.pop %v1543
        %v1672 = vtanh.pop %v1544
        %v1673 = vtanh.pop %v1545
        %v1674 = vtanh.pop %v1546
        %v1675 = vtanh.pop %v1547
        %v1676 = vtanh.pop %v1548
        %v1677 = vtanh.pop %v1549
        %v1678 = vtanh.pop %v1550
        %v1679 = vtanh.pop %v1551
        %v1680 = vtanh.pop %v1552
        %v1681 = vtanh.pop %v1553
        %v1682 = vtanh.pop %v1554
        %v1683 = vtanh.pop %v1555
        %v1684 = vtanh.pop %v1556
        %v1685 = vtanh.pop %v1557
        %v1686 = vtanh.pop %v1558
        %v1687 = vtanh.pop %v1559
        %v1688 = vtanh.pop %v1560
        %v1689 = vtanh.pop %v1561
        %v1690 = vtanh.pop %v1562
        %v1691 = vtanh.pop %v1563
        %v1692 = vtanh.pop %v1564
        %v1693 = vtanh.pop %v1565
        %v1694 = vtanh.pop %v1566
        %v1695 = vtanh.pop %v1567
        %v1696 = vtanh.pop %v1568
        %v1697 = vtanh.pop %v1569
        %v1698 = vtanh.pop %v1570
        %v1699 = vtanh.pop %v1571
        %v1700 = vtanh.pop %v1572
        %v1701 = vtanh.pop %v1573
        %v1702 = vtanh.pop %v1574
        %v1703 = vtanh.pop %v1575
        %v1704 = vtanh.pop %v1576
        %v1705 = vtanh.pop %v1577
        %v1706 = vtanh.pop %v1578
        %v1707 = vtanh.pop %v1579
        %v1708 = vtanh.pop %v1580
        %v1709 = vtanh.pop %v1581
        %v1710 = vtanh.pop %v1582
        %v1711 = vtanh.pop %v1583
        %v1712 = vtanh.pop %v1584
        %v1713 = vtanh.pop %v1585
        %v1714 = vtanh.pop %v1586
        %v1715 = vtanh.pop %v1587
        %v1716 = vtanh.pop %v1588
        %v1717 = vtanh.pop %v1589
        %v1718 = vtanh.pop %v1590
        %v1719 = vtanh.pop %v1591
        %v1720 = vtanh.pop %v1592
        %v1721 = vtanh.pop %v1593
        %v1722 = vtanh.pop %v1594
        %v1723 = vtanh.pop %v1595
        %v1724 = vtanh.pop %v1596
        %v1725 = vtanh.pop %v1597
        %v1726 = vtanh.pop %v1598
        %v1727 = vtanh.pop %v1599
        %v1728 = vtanh.pop %v1600
        %v1729 = vtanh.pop %v1601
        %v1730 = vtanh.pop %v1602
        %v1731 = vtanh.pop %v1603
        %v1732 = vtanh.pop %v1604
        %v1733 = vtanh.pop %v1605
        %v1734 = vtanh.pop %v1606
        %v1735 = vtanh.pop %v1607
        %v1736 = vtanh.pop %v1608
        %v1737 = vtanh.pop %v1609
        %v1738 = vtanh.pop %v1610
        %v1739 = vtanh.pop %v1611
        %v1740 = vtanh.pop %v1612
        %v1741 = vtanh.pop %v1613
        %v1742 = vtanh.pop %v1614
        %v1743 = vtanh.pop %v1615
        %v1744 = vtanh.pop %v1616
        %v1745 = vtanh.pop %v1617
        %v1746 = vtanh.pop %v1618
        %v1747 = vtanh.pop %v1619
        %v1748 = vtanh.pop %v1620
        %v1749 = vtanh.pop %v1621
        %v1750 = vtanh.pop %v1622
        %v1751 = vtanh.pop %v1623
        %v1752 = vtanh.pop %v1624
        %v1753 = vtanh.pop %v1625
        %v1754 = vtanh.pop %v1626
        %v1755 = vtanh.pop %v1627
        %v1756 = vtanh.pop %v1628
        %v1757 = vtanh.pop %v1629
        %v1758 = vtanh.pop %v1630
        %v1759 = vtanh.pop %v1631
        %v1760 = vtanh.pop %v1632
        %v1761 = vtanh.pop %v1633
        %v1762 = vtanh.pop %v1634
        %v1763 = vtanh.pop %v1635
        %v1764 = vtanh.pop %v1636
        %v1765 = vtanh.pop %v1637
        %v1766 = vtanh.pop %v1638
        %v1767 = vtanh.pop %v1639
        %v1768 = vtanh.pop %v1640
        %v1769 = vtanh.pop %v1641
        %v1770 = vtanh.pop %v1642
        %v1771 = vtanh.pop %v1643
        %v1772 = vtanh.pop %v1644
        %v1773 = vtanh.pop %v1645
        %v1774 = vtanh.pop %v1646
        %v1775 = vtanh.pop %v1647
        %v1776 = vtanh.pop %v1648
        %v1777 = vtanh.pop %v1649
        %v1778 = vtanh.pop %v1650
        %v1779 = vtanh.pop %v1651
        %v1780 = vtanh.pop %v1652
        %v1781 = vtanh.pop %v1653
        %v1782 = vtanh.pop %v1654
        %v1783 = vtanh.pop %v1655
        %v1784 = vtanh.pop %v1656
        %v1785 = vtanh.pop %v1657
        %v1786 = vtanh.pop %v1658
        %v1787 = vtanh.pop %v1659
        %v1788 = vtanh.pop %v1660
        %v1789 = vtanh.pop %v1661
        %v1790 = vtanh.pop %v1662
        %v1791 = vtanh.pop %v1663
        %v1792 = vtanh.pop %v1664
        %v1793 = vadd.f32 %v1665, 1.0
        %v1794 = vadd.f32 %v1666, 1.0
        %v1795 = vadd.f32 %v1667, 1.0
        %v1796 = vadd.f32 %v1668, 1.0
        %v1797 = vadd.f32 %v1669, 1.0
        %v1798 = vadd.f32 %v1670, 1.0
        %v1799 = vadd.f32 %v1671, 1.0
        %v1800 = vadd.f32 %v1672, 1.0
        %v1801 = vadd.f32 %v1673, 1.0
        %v1802 = vadd.f32 %v1674, 1.0
        %v1803 = vadd.f32 %v1675, 1.0
        %v1804 = vadd.f32 %v1676, 1.0
        %v1805 = vadd.f32 %v1677, 1.0
        %v1806 = vadd.f32 %v1678, 1.0
        %v1807 = vadd.f32 %v1679, 1.0
        %v1808 = vadd.f32 %v1680, 1.0
        %v1809 = vadd.f32 %v1681, 1.0
        %v1810 = vadd.f32 %v1682, 1.0
        %v1811 = vadd.f32 %v1683, 1.0
        %v1812 = vadd.f32 %v1684, 1.0
        %v1813 = vadd.f32 %v1685, 1.0
        %v1814 = vadd.f32 %v1686, 1.0
        %v1815 = vadd.f32 %v1687, 1.0
        %v1816 = vadd.f32 %v1688, 1.0
        %v1817 = vadd.f32 %v1689, 1.0
        %v1818 = vadd.f32 %v1690, 1.0
        %v1819 = vadd.f32 %v1691, 1.0
        %v1820 = vadd.f32 %v1692, 1.0
        %v1821 = vadd.f32 %v1693, 1.0
        %v1822 = vadd.f32 %v1694, 1.0
        %v1823 = vadd.f32 %v1695, 1.0
        %v1824 = vadd.f32 %v1696, 1.0
        %v1825 = vadd.f32 %v1697, 1.0
        %v1826 = vadd.f32 %v1698, 1.0
        %v1827 = vadd.f32 %v1699, 1.0
        %v1828 = vadd.f32 %v1700, 1.0
        %v1829 = vadd.f32 %v1701, 1.0
        %v1830 = vadd.f32 %v1702, 1.0
        %v1831 = vadd.f32 %v1703, 1.0
        %v1832 = vadd.f32 %v1704, 1.0
        %v1833 = vadd.f32 %v1705, 1.0
        %v1834 = vadd.f32 %v1706, 1.0
        %v1835 = vadd.f32 %v1707, 1.0
        %v1836 = vadd.f32 %v1708, 1.0
        %v1837 = vadd.f32 %v1709, 1.0
        %v1838 = vadd.f32 %v1710, 1.0
        %v1839 = vadd.f32 %v1711, 1.0
        %v1840 = vadd.f32 %v1712, 1.0
        %v1841 = vadd.f32 %v1713, 1.0
        %v1842 = vadd.f32 %v1714, 1.0
        %v1843 = vadd.f32 %v1715, 1.0
        %v1844 = vadd.f32 %v1716, 1.0
        %v1845 = vadd.f32 %v1717, 1.0
        %v1846 = vadd.f32 %v1718, 1.0
        %v1847 = vadd.f32 %v1719, 1.0
        %v1848 = vadd.f32 %v1720, 1.0
        %v1849 = vadd.f32 %v1721, 1.0
        %v1850 = vadd.f32 %v1722, 1.0
        %v1851 = vadd.f32 %v1723, 1.0
        %v1852 = vadd.f32 %v1724, 1.0
        %v1853 = vadd.f32 %v1725, 1.0
        %v1854 = vadd.f32 %v1726, 1.0
        %v1855 = vadd.f32 %v1727, 1.0
        %v1856 = vadd.f32 %v1728, 1.0
        %v1857 = vadd.f32 %v1729, 1.0
        %v1858 = vadd.f32 %v1730, 1.0
        %v1859 = vadd.f32 %v1731, 1.0
        %v1860 = vadd.f32 %v1732, 1.0
        %v1861 = vadd.f32 %v1733, 1.0
        %v1862 = vadd.f32 %v1734, 1.0
        %v1863 = vadd.f32 %v1735, 1.0
        %v1864 = vadd.f32 %v1736, 1.0
        %v1865 = vadd.f32 %v1737, 1.0
        %v1866 = vadd.f32 %v1738, 1.0
        %v1867 = vadd.f32 %v1739, 1.0
        %v1868 = vadd.f32 %v1740, 1.0
        %v1869 = vadd.f32 %v1741, 1.0
        %v1870 = vadd.f32 %v1742, 1.0
        %v1871 = vadd.f32 %v1743, 1.0
        %v1872 = vadd.f32 %v1744, 1.0
        %v1873 = vadd.f32 %v1745, 1.0
        %v1874 = vadd.f32 %v1746, 1.0
        %v1875 = vadd.f32 %v1747, 1.0
        %v1876 = vadd.f32 %v1748, 1.0
        %v1877 = vadd.f32 %v1749, 1.0
        %v1878 = vadd.f32 %v1750, 1.0
        %v1879 = vadd.f32 %v1751, 1.0
        %v1880 = vadd.f32 %v1752, 1.0
        %v1881 = vadd.f32 %v1753, 1.0
        %v1882 = vadd.f32 %v1754, 1.0
        %v1883 = vadd.f32 %v1755, 1.0
        %v1884 = vadd.f32 %v1756, 1.0
        %v1885 = vadd.f32 %v1757, 1.0
        %v1886 = vadd.f32 %v1758, 1.0
        %v1887 = vadd.f32 %v1759, 1.0
        %v1888 = vadd.f32 %v1760, 1.0
        %v1889 = vadd.f32 %v1761, 1.0
        %v1890 = vadd.f32 %v1762, 1.0
        %v1891 = vadd.f32 %v1763, 1.0
        %v1892 = vadd.f32 %v1764, 1.0
        %v1893 = vadd.f32 %v1765, 1.0
        %v1894 = vadd.f32 %v1766, 1.0
        %v1895 = vadd.f32 %v1767, 1.0
        %v1896 = vadd.f32 %v1768, 1.0
        %v1897 = vadd.f32 %v1769, 1.0
        %v1898 = vadd.f32 %v1770, 1.0
        %v1899 = vadd.f32 %v1771, 1.0
        %v1900 = vadd.f32 %v1772, 1.0
        %v1901 = vadd.f32 %v1773, 1.0
        %v1902 = vadd.f32 %v1774, 1.0
        %v1903 = vadd.f32 %v1775, 1.0
        %v1904 = vadd.f32 %v1776, 1.0
        %v1905 = vadd.f32 %v1777, 1.0
        %v1906 = vadd.f32 %v1778, 1.0
        %v1907 = vadd.f32 %v1779, 1.0
        %v1908 = vadd.f32 %v1780, 1.0
        %v1909 = vadd.f32 %v1781, 1.0
        %v1910 = vadd.f32 %v1782, 1.0
        %v1911 = vadd.f32 %v1783, 1.0
        %v1912 = vadd.f32 %v1784, 1.0
        %v1913 = vadd.f32 %v1785, 1.0
        %v1914 = vadd.f32 %v1786, 1.0
        %v1915 = vadd.f32 %v1787, 1.0
        %v1916 = vadd.f32 %v1788, 1.0
        %v1917 = vadd.f32 %v1789, 1.0
        %v1918 = vadd.f32 %v1790, 1.0
        %v1919 = vadd.f32 %v1791, 1.0
        %v1920 = vadd.f32 %v1792, 1.0
        %v1921 = vmul.f32 %v1793, 0.5
        %v1922 = vmul.f32 %v1794, 0.5
        %v1923 = vmul.f32 %v1795, 0.5
        %v1924 = vmul.f32 %v1796, 0.5
        %v1925 = vmul.f32 %v1797, 0.5
        %v1926 = vmul.f32 %v1798, 0.5
        %v1927 = vmul.f32 %v1799, 0.5
        %v1928 = vmul.f32 %v1800, 0.5
        %v1929 = vmul.f32 %v1801, 0.5
        %v1930 = vmul.f32 %v1802, 0.5
        %v1931 = vmul.f32 %v1803, 0.5
        %v1932 = vmul.f32 %v1804, 0.5
        %v1933 = vmul.f32 %v1805, 0.5
        %v1934 = vmul.f32 %v1806, 0.5
        %v1935 = vmul.f32 %v1807, 0.5
        %v1936 = vmul.f32 %v1808, 0.5
        %v1937 = vmul.f32 %v1809, 0.5
        %v1938 = vmul.f32 %v1810, 0.5
        %v1939 = vmul.f32 %v1811, 0.5
        %v1940 = vmul.f32 %v1812, 0.5
        %v1941 = vmul.f32 %v1813, 0.5
        %v1942 = vmul.f32 %v1814, 0.5
        %v1943 = vmul.f32 %v1815, 0.5
        %v1944 = vmul.f32 %v1816, 0.5
        %v1945 = vmul.f32 %v1817, 0.5
        %v1946 = vmul.f32 %v1818, 0.5
        %v1947 = vmul.f32 %v1819, 0.5
        %v1948 = vmul.f32 %v1820, 0.5
        %v1949 = vmul.f32 %v1821, 0.5
        %v1950 = vmul.f32 %v1822, 0.5
        %v1951 = vmul.f32 %v1823, 0.5
        %v1952 = vmul.f32 %v1824, 0.5
        %v1953 = vmul.f32 %v1825, 0.5
        %v1954 = vmul.f32 %v1826, 0.5
        %v1955 = vmul.f32 %v1827, 0.5
        %v1956 = vmul.f32 %v1828, 0.5
        %v1957 = vmul.f32 %v1829, 0.5
        %v1958 = vmul.f32 %v1830, 0.5
        %v1959 = vmul.f32 %v1831, 0.5
        %v1960 = vmul.f32 %v1832, 0.5
        %v1961 = vmul.f32 %v1833, 0.5
        %v1962 = vmul.f32 %v1834, 0.5
        %v1963 = vmul.f32 %v1835, 0.5
        %v1964 = vmul.f32 %v1836, 0.5
        %v1965 = vmul.f32 %v1837, 0.5
        %v1966 = vmul.f32 %v1838, 0.5
        %v1967 = vmul.f32 %v1839, 0.5
        %v1968 = vmul.f32 %v1840, 0.5
        %v1969 = vmul.f32 %v1841, 0.5
        %v1970 = vmul.f32 %v1842, 0.5
        %v1971 = vmul.f32 %v1843, 0.5
        %v1972 = vmul.f32 %v1844, 0.5
        %v1973 = vmul.f32 %v1845, 0.5
        %v1974 = vmul.f32 %v1846, 0.5
        %v1975 = vmul.f32 %v1847, 0.5
        %v1976 = vmul.f32 %v1848, 0.5
        %v1977 = vmul.f32 %v1849, 0.5
        %v1978 = vmul.f32 %v1850, 0.5
        %v1979 = vmul.f32 %v1851, 0.5
        %v1980 = vmul.f32 %v1852, 0.5
        %v1981 = vmul.f32 %v1853, 0.5
        %v1982 = vmul.f32 %v1854, 0.5
        %v1983 = vmul.f32 %v1855, 0.5
        %v1984 = vmul.f32 %v1856, 0.5
        %v1985 = vmul.f32 %v1857, 0.5
        %v1986 = vmul.f32 %v1858, 0.5
        %v1987 = vmul.f32 %v1859, 0.5
        %v1988 = vmul.f32 %v1860, 0.5
        %v1989 = vmul.f32 %v1861, 0.5
        %v1990 = vmul.f32 %v1862, 0.5
        %v1991 = vmul.f32 %v1863, 0.5
        %v1992 = vmul.f32 %v1864, 0.5
        %v1993 = vmul.f32 %v1865, 0.5
        %v1994 = vmul.f32 %v1866, 0.5
        %v1995 = vmul.f32 %v1867, 0.5
        %v1996 = vmul.f32 %v1868, 0.5
        %v1997 = vmul.f32 %v1869, 0.5
        %v1998 = vmul.f32 %v1870, 0.5
        %v1999 = vmul.f32 %v1871, 0.5
        %v2000 = vmul.f32 %v1872, 0.5
        %v2001 = vmul.f32 %v1873, 0.5
        %v2002 = vmul.f32 %v1874, 0.5
        %v2003 = vmul.f32 %v1875, 0.5
        %v2004 = vmul.f32 %v1876, 0.5
        %v2005 = vmul.f32 %v1877, 0.5
        %v2006 = vmul.f32 %v1878, 0.5
        %v2007 = vmul.f32 %v1879, 0.5
        %v2008 = vmul.f32 %v1880, 0.5
        %v2009 = vmul.f32 %v1881, 0.5
        %v2010 = vmul.f32 %v1882, 0.5
        %v2011 = vmul.f32 %v1883, 0.5
        %v2012 = vmul.f32 %v1884, 0.5
        %v2013 = vmul.f32 %v1885, 0.5
        %v2014 = vmul.f32 %v1886, 0.5
        %v2015 = vmul.f32 %v1887, 0.5
        %v2016 = vmul.f32 %v1888, 0.5
        %v2017 = vmul.f32 %v1889, 0.5
        %v2018 = vmul.f32 %v1890, 0.5
        %v2019 = vmul.f32 %v1891, 0.5
        %v2020 = vmul.f32 %v1892, 0.5
        %v2021 = vmul.f32 %v1893, 0.5
        %v2022 = vmul.f32 %v1894, 0.5
        %v2023 = vmul.f32 %v1895, 0.5
        %v2024 = vmul.f32 %v1896, 0.5
        %v2025 = vmul.f32 %v1897, 0.5
        %v2026 = vmul.f32 %v1898, 0.5
        %v2027 = vmul.f32 %v1899, 0.5
        %v2028 = vmul.f32 %v1900, 0.5
        %v2029 = vmul.f32 %v1901, 0.5
        %v2030 = vmul.f32 %v1902, 0.5
        %v2031 = vmul.f32 %v1903, 0.5
        %v2032 = vmul.f32 %v1904, 0.5
        %v2033 = vmul.f32 %v1905, 0.5
        %v2034 = vmul.f32 %v1906, 0.5
        %v2035 = vmul.f32 %v1907, 0.5
        %v2036 = vmul.f32 %v1908, 0.5
        %v2037 = vmul.f32 %v1909, 0.5
        %v2038 = vmul.f32 %v1910, 0.5
        %v2039 = vmul.f32 %v1911, 0.5
        %v2040 = vmul.f32 %v1912, 0.5
        %v2041 = vmul.f32 %v1913, 0.5
        %v2042 = vmul.f32 %v1914, 0.5
        %v2043 = vmul.f32 %v1915, 0.5
        %v2044 = vmul.f32 %v1916, 0.5
        %v2045 = vmul.f32 %v1917, 0.5
        %v2046 = vmul.f32 %v1918, 0.5
        %v2047 = vmul.f32 %v1919, 0.5
        %v2048 = vmul.f32 %v1920, 0.5
        %v2049 = vmul.f32 %v707, %v1921
        %v2050 = vmul.f32 %v709, %v1922
        %v2051 = vmul.f32 %v711, %v1923
        %v2052 = vmul.f32 %v713, %v1924
        %v2053 = vmul.f32 %v717, %v1925
        %v2054 = vmul.f32 %v719, %v1926
        %v2055 = vmul.f32 %v721, %v1927
        %v2056 = vmul.f32 %v723, %v1928
        %v2057 = vmul.f32 %v727, %v1929
        %v2058 = vmul.f32 %v729, %v1930
        %v2059 = vmul.f32 %v731, %v1931
        %v2060 = vmul.f32 %v733, %v1932
        %v2061 = vmul.f32 %v737, %v1933
        %v2062 = vmul.f32 %v739, %v1934
        %v2063 = vmul.f32 %v741, %v1935
        %v2064 = vmul.f32 %v743, %v1936
        %v2065 = vmul.f32 %v747, %v1937
        %v2066 = vmul.f32 %v749, %v1938
        %v2067 = vmul.f32 %v751, %v1939
        %v2068 = vmul.f32 %v753, %v1940
        %v2069 = vmul.f32 %v757, %v1941
        %v2070 = vmul.f32 %v759, %v1942
        %v2071 = vmul.f32 %v761, %v1943
        %v2072 = vmul.f32 %v763, %v1944
        %v2073 = vmul.f32 %v767, %v1945
        %v2074 = vmul.f32 %v769, %v1946
        %v2075 = vmul.f32 %v771, %v1947
        %v2076 = vmul.f32 %v773, %v1948
        %v2077 = vmul.f32 %v777, %v1949
        %v2078 = vmul.f32 %v779, %v1950
        %v2079 = vmul.f32 %v781, %v1951
        %v2080 = vmul.f32 %v783, %v1952
        %v2081 = vmul.f32 %v787, %v1953
        %v2082 = vmul.f32 %v789, %v1954
        %v2083 = vmul.f32 %v791, %v1955
        %v2084 = vmul.f32 %v793, %v1956
        %v2085 = vmul.f32 %v797, %v1957
        %v2086 = vmul.f32 %v799, %v1958
        %v2087 = vmul.f32 %v801, %v1959
        %v2088 = vmul.f32 %v803, %v1960
        %v2089 = vmul.f32 %v807, %v1961
        %v2090 = vmul.f32 %v809, %v1962
        %v2091 = vmul.f32 %v811, %v1963
        %v2092 = vmul.f32 %v813, %v1964
        %v2093 = vmul.f32 %v817, %v1965
        %v2094 = vmul.f32 %v819, %v1966
        %v2095 = vmul.f32 %v821, %v1967
        %v2096 = vmul.f32 %v823, %v1968
        %v2097 = vmul.f32 %v827, %v1969
        %v2098 = vmul.f32 %v829, %v1970
        %v2099 = vmul.f32 %v831, %v1971
        %v2100 = vmul.f32 %v833, %v1972
        %v2101 = vmul.f32 %v837, %v1973
        %v2102 = vmul.f32 %v839, %v1974
        %v2103 = vmul.f32 %v841, %v1975
        %v2104 = vmul.f32 %v843, %v1976
        %v2105 = vmul.f32 %v847, %v1977
        %v2106 = vmul.f32 %v849, %v1978
        %v2107 = vmul.f32 %v851, %v1979
        %v2108 = vmul.f32 %v853, %v1980
        %v2109 = vmul.f32 %v857, %v1981
        %v2110 = vmul.f32 %v859, %v1982
        %v2111 = vmul.f32 %v861, %v1983
        %v2112 = vmul.f32 %v863, %v1984
        %v2113 = vmul.f32 %v867, %v1985
        %v2114 = vmul.f32 %v869, %v1986
        %v2115 = vmul.f32 %v871, %v1987
        %v2116 = vmul.f32 %v873, %v1988
        %v2117 = vmul.f32 %v877, %v1989
        %v2118 = vmul.f32 %v879, %v1990
        %v2119 = vmul.f32 %v881, %v1991
        %v2120 = vmul.f32 %v883, %v1992
        %v2121 = vmul.f32 %v887, %v1993
        %v2122 = vmul.f32 %v889, %v1994
        %v2123 = vmul.f32 %v891, %v1995
        %v2124 = vmul.f32 %v893, %v1996
        %v2125 = vmul.f32 %v897, %v1997
        %v2126 = vmul.f32 %v899, %v1998
        %v2127 = vmul.f32 %v901, %v1999
        %v2128 = vmul.f32 %v903, %v2000
        %v2129 = vmul.f32 %v907, %v2001
        %v2130 = vmul.f32 %v909, %v2002
        %v2131 = vmul.f32 %v911, %v2003
        %v2132 = vmul.f32 %v913, %v2004
        %v2133 = vmul.f32 %v917, %v2005
        %v2134 = vmul.f32 %v919, %v2006
        %v2135 = vmul.f32 %v921, %v2007
        %v2136 = vmul.f32 %v923, %v2008
        %v2137 = vmul.f32 %v927, %v2009
        %v2138 = vmul.f32 %v929, %v2010
        %v2139 = vmul.f32 %v931, %v2011
        %v2140 = vmul.f32 %v933, %v2012
        %v2141 = vmul.f32 %v937, %v2013
        %v2142 = vmul.f32 %v939, %v2014
        %v2143 = vmul.f32 %v941, %v2015
        %v2144 = vmul.f32 %v943, %v2016
        %v2145 = vmul.f32 %v947, %v2017
        %v2146 = vmul.f32 %v949, %v2018
        %v2147 = vmul.f32 %v951, %v2019
        %v2148 = vmul.f32 %v953, %v2020
        %v2149 = vmul.f32 %v957, %v2021
        %v2150 = vmul.f32 %v959, %v2022
        %v2151 = vmul.f32 %v961, %v2023
        %v2152 = vmul.f32 %v963, %v2024
        %v2153 = vmul.f32 %v967, %v2025
        %v2154 = vmul.f32 %v969, %v2026
        %v2155 = vmul.f32 %v971, %v2027
        %v2156 = vmul.f32 %v973, %v2028
        %v2157 = vmul.f32 %v977, %v2029
        %v2158 = vmul.f32 %v979, %v2030
        %v2159 = vmul.f32 %v981, %v2031
        %v2160 = vmul.f32 %v983, %v2032
        %v2161 = vmul.f32 %v987, %v2033
        %v2162 = vmul.f32 %v989, %v2034
        %v2163 = vmul.f32 %v991, %v2035
        %v2164 = vmul.f32 %v993, %v2036
        %v2165 = vmul.f32 %v997, %v2037
        %v2166 = vmul.f32 %v999, %v2038
        %v2167 = vmul.f32 %v1001, %v2039
        %v2168 = vmul.f32 %v1003, %v2040
        %v2169 = vmul.f32 %v1007, %v2041
        %v2170 = vmul.f32 %v1009, %v2042
        %v2171 = vmul.f32 %v1011, %v2043
        %v2172 = vmul.f32 %v1013, %v2044
        %v2173 = vmul.f32 %v1017, %v2045
        %v2174 = vmul.f32 %v1019, %v2046
        %v2175 = vmul.f32 %v1021, %v2047
        %v2176 = vmul.f32 %v1023, %v2048
        %v2177 = vpack.c.bf16 %v2051, %v2049
        %v2178 = vpack.c.bf16 %v2052, %v2050
        %v2179 = vpack.c.bf16 %v2055, %v2053
        %v2180 = vpack.c.bf16 %v2056, %v2054
        %v2181 = vpack.c.bf16 %v2059, %v2057
        %v2182 = vpack.c.bf16 %v2060, %v2058
        %v2183 = vpack.c.bf16 %v2063, %v2061
        %v2184 = vpack.c.bf16 %v2064, %v2062
        %v2185 = vpack.c.bf16 %v2067, %v2065
        %v2186 = vpack.c.bf16 %v2068, %v2066
        %v2187 = vpack.c.bf16 %v2071, %v2069
        %v2188 = vpack.c.bf16 %v2072, %v2070
        %v2189 = vpack.c.bf16 %v2075, %v2073
        %v2190 = vpack.c.bf16 %v2076, %v2074
        %v2191 = vpack.c.bf16 %v2079, %v2077
        %v2192 = vpack.c.bf16 %v2080, %v2078
        %v2193 = vpack.c.bf16 %v2083, %v2081
        %v2194 = vpack.c.bf16 %v2084, %v2082
        %v2195 = vpack.c.bf16 %v2087, %v2085
        %v2196 = vpack.c.bf16 %v2088, %v2086
        %v2197 = vpack.c.bf16 %v2091, %v2089
        %v2198 = vpack.c.bf16 %v2092, %v2090
        %v2199 = vpack.c.bf16 %v2095, %v2093
        %v2200 = vpack.c.bf16 %v2096, %v2094
        %v2201 = vpack.c.bf16 %v2099, %v2097
        %v2202 = vpack.c.bf16 %v2100, %v2098
        %v2203 = vpack.c.bf16 %v2103, %v2101
        %v2204 = vpack.c.bf16 %v2104, %v2102
        %v2205 = vpack.c.bf16 %v2107, %v2105
        %v2206 = vpack.c.bf16 %v2108, %v2106
        %v2207 = vpack.c.bf16 %v2111, %v2109
        %v2208 = vpack.c.bf16 %v2112, %v2110
        %v2209 = vpack.c.bf16 %v2115, %v2113
        %v2210 = vpack.c.bf16 %v2116, %v2114
        %v2211 = vpack.c.bf16 %v2119, %v2117
        %v2212 = vpack.c.bf16 %v2120, %v2118
        %v2213 = vpack.c.bf16 %v2123, %v2121
        %v2214 = vpack.c.bf16 %v2124, %v2122
        %v2215 = vpack.c.bf16 %v2127, %v2125
        %v2216 = vpack.c.bf16 %v2128, %v2126
        %v2217 = vpack.c.bf16 %v2131, %v2129
        %v2218 = vpack.c.bf16 %v2132, %v2130
        %v2219 = vpack.c.bf16 %v2135, %v2133
        %v2220 = vpack.c.bf16 %v2136, %v2134
        %v2221 = vpack.c.bf16 %v2139, %v2137
        %v2222 = vpack.c.bf16 %v2140, %v2138
        %v2223 = vpack.c.bf16 %v2143, %v2141
        %v2224 = vpack.c.bf16 %v2144, %v2142
        %v2225 = vpack.c.bf16 %v2147, %v2145
        %v2226 = vpack.c.bf16 %v2148, %v2146
        %v2227 = vpack.c.bf16 %v2151, %v2149
        %v2228 = vpack.c.bf16 %v2152, %v2150
        %v2229 = vpack.c.bf16 %v2155, %v2153
        %v2230 = vpack.c.bf16 %v2156, %v2154
        %v2231 = vpack.c.bf16 %v2159, %v2157
        %v2232 = vpack.c.bf16 %v2160, %v2158
        %v2233 = vpack.c.bf16 %v2163, %v2161
        %v2234 = vpack.c.bf16 %v2164, %v2162
        %v2235 = vpack.c.bf16 %v2167, %v2165
        %v2236 = vpack.c.bf16 %v2168, %v2166
        %v2237 = vpack.c.bf16 %v2171, %v2169
        %v2238 = vpack.c.bf16 %v2172, %v2170
        %v2239 = vpack.c.bf16 %v2175, %v2173
        %v2240 = vpack.c.bf16 %v2176, %v2174
        %v2242 = vlaneseq
        %v2243 = vshrl.u32 %v2242, 7
        %v2244 = vsub.s32 0, %v2243
        %v2245 = vrot.slane %v388, %v2244
        %v2279 = vunpack.c.l.b16 %v356
        %v2280 = vunpack.c.l.b16 %v357
        %v2281 = vunpack.c.l.b16 %v358
        %v2282 = vunpack.c.l.b16 %v359
        %v2283 = vunpack.c.l.b16 %v360
        %v2284 = vunpack.c.l.b16 %v361
        %v2285 = vunpack.c.l.b16 %v362
        %v2286 = vunpack.c.l.b16 %v363
        %v2287 = vunpack.c.l.b16 %v364
        %v2288 = vunpack.c.l.b16 %v365
        %v2289 = vunpack.c.l.b16 %v366
        %v2290 = vunpack.c.l.b16 %v367
        %v2291 = vunpack.c.l.b16 %v368
        %v2292 = vunpack.c.l.b16 %v369
        %v2293 = vunpack.c.l.b16 %v370
        %v2294 = vunpack.c.l.b16 %v371
        %v2295 = vunpack.c.l.b16 %v372
        %v2296 = vunpack.c.l.b16 %v373
        %v2297 = vunpack.c.l.b16 %v374
        %v2298 = vunpack.c.l.b16 %v375
        %v2299 = vunpack.c.l.b16 %v376
        %v2300 = vunpack.c.l.b16 %v377
        %v2301 = vunpack.c.l.b16 %v378
        %v2302 = vunpack.c.l.b16 %v379
        %v2303 = vunpack.c.l.b16 %v380
        %v2304 = vunpack.c.l.b16 %v381
        %v2305 = vunpack.c.l.b16 %v382
        %v2306 = vunpack.c.l.b16 %v383
        %v2307 = vunpack.c.l.b16 %v384
        %v2308 = vunpack.c.l.b16 %v385
        %v2309 = vunpack.c.l.b16 %v386
        %v2310 = vunpack.c.l.b16 %v387
        %v2311 = vpack.c.b16 %v2280, %v2279
        %v2312 = vpack.c.b16 %v2282, %v2281
        %v2313 = vpack.c.b16 %v2284, %v2283
        %v2314 = vpack.c.b16 %v2286, %v2285
        %v2315 = vpack.c.b16 %v2288, %v2287
        %v2316 = vpack.c.b16 %v2290, %v2289
        %v2317 = vpack.c.b16 %v2292, %v2291
        %v2318 = vpack.c.b16 %v2294, %v2293
        %v2319 = vpack.c.b16 %v2296, %v2295
        %v2320 = vpack.c.b16 %v2298, %v2297
        %v2321 = vpack.c.b16 %v2300, %v2299
        %v2322 = vpack.c.b16 %v2302, %v2301
        %v2323 = vpack.c.b16 %v2304, %v2303
        %v2324 = vpack.c.b16 %v2306, %v2305
        %v2325 = vpack.c.b16 %v2308, %v2307
        %v2326 = vpack.c.b16 %v2310, %v2309
        %2343 = vmatprep.subr.bf16.mxu0 0
        %2344 = vmatpush1.bf16.msra.mxu0 %v2318
        %2345 = vmatprep.subr.bf16.mxu0 0
        %2346 = vmatpush1.bf16.msra.mxu0 %v2317
        %2347 = vmatprep.subr.bf16.mxu0 0
        %2348 = vmatpush1.bf16.msra.mxu0 %v2316
        %2349 = vmatprep.subr.bf16.mxu0 0
        %2350 = vmatpush1.bf16.msra.mxu0 %v2315
        %2351 = vmatprep.subr.bf16.mxu0 0
        %2352 = vmatpush1.bf16.msra.mxu0 %v2314
        %2353 = vmatprep.subr.bf16.mxu0 0
        %2354 = vmatpush1.bf16.msra.mxu0 %v2313
        %2355 = vmatprep.subr.bf16.mxu0 0
        %2356 = vmatpush1.bf16.msra.mxu0 %v2312
        %2357 = vmatprep.subr.bf16.mxu0 0
        %2358 = vmatpush1.bf16.msra.mxu0 %v2311
        %2359 = vmatprep.subr.bf16.mxu0 0
        %2360 = vmatpush2.bf16.msra.mxu0 %v2326
        %2361 = vmatprep.subr.bf16.mxu0 0
        %2362 = vmatpush2.bf16.msra.mxu0 %v2325
        %2363 = vmatprep.subr.bf16.mxu0 0
        %2364 = vmatpush2.bf16.msra.mxu0 %v2324
        %2365 = vmatprep.subr.bf16.mxu0 0
        %2366 = vmatpush2.bf16.msra.mxu0 %v2323
        %2367 = vmatprep.subr.bf16.mxu0 0
        %2368 = vmatpush2.bf16.msra.mxu0 %v2322
        %2369 = vmatprep.subr.bf16.mxu0 0
        %2370 = vmatpush2.bf16.msra.mxu0 %v2321
        %2371 = vmatprep.subr.bf16.mxu0 0
        %2372 = vmatpush2.bf16.msra.mxu0 %v2320
        %2373 = vmatprep.subr.bf16.mxu0 0
        %2374 = vmatpush2.bf16.msra.mxu0 %v2319
        %2375 = vmatprep.mubr.bf16.mxu0 %v2178
        %2376 = vmatmul.mubr.bf16.gmra.mxu0 %v2177
        %v2377 = vpop.f32.mrf.mxu0
        %v2378 = vadd.f32 %v2245, %v2377
        %v2379 = vpop.f32.mrf.mxu0
        %v2380 = vpop.f32.mrf.mxu0
        %v2381 = vadd.f32 %v2245, %v2380
        %v2382 = vpop.f32.mrf.mxu0
        %2383 = vmatprep.mubr.bf16.mxu0 %v2180
        %2384 = vmatmul.mubr.bf16.gmra.mxu0 %v2179
        %v2385 = vpop.f32.mrf.mxu0
        %v2386 = vadd.f32 %v2245, %v2385
        %v2387 = vpop.f32.mrf.mxu0
        %v2388 = vpop.f32.mrf.mxu0
        %v2389 = vadd.f32 %v2245, %v2388
        %v2390 = vpop.f32.mrf.mxu0
        %2391 = vmatprep.mubr.bf16.mxu0 %v2182
        %2392 = vmatmul.mubr.bf16.gmra.mxu0 %v2181
        %v2393 = vpop.f32.mrf.mxu0
        %v2394 = vadd.f32 %v2245, %v2393
        %v2395 = vpop.f32.mrf.mxu0
        %v2396 = vpop.f32.mrf.mxu0
        %v2397 = vadd.f32 %v2245, %v2396
        %v2398 = vpop.f32.mrf.mxu0
        %2399 = vmatprep.mubr.bf16.mxu0 %v2184
        %2400 = vmatmul.mubr.bf16.gmra.mxu0 %v2183
        %v2401 = vpop.f32.mrf.mxu0
        %v2402 = vadd.f32 %v2245, %v2401
        %v2403 = vpop.f32.mrf.mxu0
        %v2404 = vpop.f32.mrf.mxu0
        %v2405 = vadd.f32 %v2245, %v2404
        %v2406 = vpop.f32.mrf.mxu0
        %2407 = vmatprep.mubr.bf16.mxu0 %v2186
        %2408 = vmatmul.mubr.bf16.gmra.mxu0 %v2185
        %v2409 = vpop.f32.mrf.mxu0
        %v2410 = vadd.f32 %v2245, %v2409
        %v2411 = vpop.f32.mrf.mxu0
        %v2412 = vpop.f32.mrf.mxu0
        %v2413 = vadd.f32 %v2245, %v2412
        %v2414 = vpop.f32.mrf.mxu0
        %2415 = vmatprep.mubr.bf16.mxu0 %v2188
        %2416 = vmatmul.mubr.bf16.gmra.mxu0 %v2187
        %v2417 = vpop.f32.mrf.mxu0
        %v2418 = vadd.f32 %v2245, %v2417
        %v2419 = vpop.f32.mrf.mxu0
        %v2420 = vpop.f32.mrf.mxu0
        %v2421 = vadd.f32 %v2245, %v2420
        %v2422 = vpop.f32.mrf.mxu0
        %2423 = vmatprep.mubr.bf16.mxu0 %v2190
        %2424 = vmatmul.mubr.bf16.gmra.mxu0 %v2189
        %v2425 = vpop.f32.mrf.mxu0
        %v2426 = vadd.f32 %v2245, %v2425
        %v2427 = vpop.f32.mrf.mxu0
        %v2428 = vpop.f32.mrf.mxu0
        %v2429 = vadd.f32 %v2245, %v2428
        %v2430 = vpop.f32.mrf.mxu0
        %2431 = vmatprep.mubr.bf16.mxu0 %v2192
        %2432 = vmatmul.mubr.bf16.gmra.mxu0 %v2191
        %v2433 = vpop.f32.mrf.mxu0
        %v2434 = vadd.f32 %v2245, %v2433
        %v2435 = vpop.f32.mrf.mxu0
        %v2436 = vpop.f32.mrf.mxu0
        %v2437 = vadd.f32 %v2245, %v2436
        %v2438 = vpop.f32.mrf.mxu0
        %2439 = vmatprep.mubr.bf16.mxu0 %v2194
        %2440 = vmatmul.mubr.bf16.gmra.mxu0 %v2193
        %v2441 = vpop.f32.mrf.mxu0
        %v2442 = vadd.f32 %v2245, %v2441
        %v2443 = vpop.f32.mrf.mxu0
        %v2444 = vpop.f32.mrf.mxu0
        %v2445 = vadd.f32 %v2245, %v2444
        %v2446 = vpop.f32.mrf.mxu0
        %2447 = vmatprep.mubr.bf16.mxu0 %v2196
        %2448 = vmatmul.mubr.bf16.gmra.mxu0 %v2195
        %v2449 = vpop.f32.mrf.mxu0
        %v2450 = vadd.f32 %v2245, %v2449
        %v2451 = vpop.f32.mrf.mxu0
        %v2452 = vpop.f32.mrf.mxu0
        %v2453 = vadd.f32 %v2245, %v2452
        %v2454 = vpop.f32.mrf.mxu0
        %2455 = vmatprep.mubr.bf16.mxu0 %v2198
        %2456 = vmatmul.mubr.bf16.gmra.mxu0 %v2197
        %v2457 = vpop.f32.mrf.mxu0
        %v2458 = vadd.f32 %v2245, %v2457
        %v2459 = vpop.f32.mrf.mxu0
        %v2460 = vpop.f32.mrf.mxu0
        %v2461 = vadd.f32 %v2245, %v2460
        %v2462 = vpop.f32.mrf.mxu0
        %2463 = vmatprep.mubr.bf16.mxu0 %v2200
        %2464 = vmatmul.mubr.bf16.gmra.mxu0 %v2199
        %v2465 = vpop.f32.mrf.mxu0
        %v2466 = vadd.f32 %v2245, %v2465
        %v2467 = vpop.f32.mrf.mxu0
        %v2468 = vpop.f32.mrf.mxu0
        %v2469 = vadd.f32 %v2245, %v2468
        %v2470 = vpop.f32.mrf.mxu0
        %2471 = vmatprep.mubr.bf16.mxu0 %v2202
        %2472 = vmatmul.mubr.bf16.gmra.mxu0 %v2201
        %v2473 = vpop.f32.mrf.mxu0
        %v2474 = vadd.f32 %v2245, %v2473
        %v2475 = vpop.f32.mrf.mxu0
        %v2476 = vpop.f32.mrf.mxu0
        %v2477 = vadd.f32 %v2245, %v2476
        %v2478 = vpop.f32.mrf.mxu0
        %2479 = vmatprep.mubr.bf16.mxu0 %v2204
        %2480 = vmatmul.mubr.bf16.gmra.mxu0 %v2203
        %v2481 = vpop.f32.mrf.mxu0
        %v2482 = vadd.f32 %v2245, %v2481
        %v2483 = vpop.f32.mrf.mxu0
        %v2484 = vpop.f32.mrf.mxu0
        %v2485 = vadd.f32 %v2245, %v2484
        %v2486 = vpop.f32.mrf.mxu0
        %2487 = vmatprep.mubr.bf16.mxu0 %v2206
        %2488 = vmatmul.mubr.bf16.gmra.mxu0 %v2205
        %v2489 = vpop.f32.mrf.mxu0
        %v2490 = vadd.f32 %v2245, %v2489
        %v2491 = vpop.f32.mrf.mxu0
        %v2492 = vpop.f32.mrf.mxu0
        %v2493 = vadd.f32 %v2245, %v2492
        %v2494 = vpop.f32.mrf.mxu0
        %2495 = vmatprep.mubr.bf16.mxu0 %v2208
        %2496 = vmatmul.mubr.bf16.gmra.mxu0 %v2207
        %v2497 = vpop.f32.mrf.mxu0
        %v2498 = vadd.f32 %v2245, %v2497
        %v2499 = vpop.f32.mrf.mxu0
        %v2500 = vpop.f32.mrf.mxu0
        %v2501 = vadd.f32 %v2245, %v2500
        %v2502 = vpop.f32.mrf.mxu0
        %2503 = vmatprep.mubr.bf16.mxu0 %v2210
        %2504 = vmatmul.mubr.bf16.gmra.mxu0 %v2209
        %v2505 = vpop.f32.mrf.mxu0
        %v2506 = vadd.f32 %v2245, %v2505
        %v2507 = vpop.f32.mrf.mxu0
        %v2508 = vpop.f32.mrf.mxu0
        %v2509 = vadd.f32 %v2245, %v2508
        %v2510 = vpop.f32.mrf.mxu0
        %2511 = vmatprep.mubr.bf16.mxu0 %v2212
        %2512 = vmatmul.mubr.bf16.gmra.mxu0 %v2211
        %v2513 = vpop.f32.mrf.mxu0
        %v2514 = vadd.f32 %v2245, %v2513
        %v2515 = vpop.f32.mrf.mxu0
        %v2516 = vpop.f32.mrf.mxu0
        %v2517 = vadd.f32 %v2245, %v2516
        %v2518 = vpop.f32.mrf.mxu0
        %2519 = vmatprep.mubr.bf16.mxu0 %v2214
        %2520 = vmatmul.mubr.bf16.gmra.mxu0 %v2213
        %v2521 = vpop.f32.mrf.mxu0
        %v2522 = vadd.f32 %v2245, %v2521
        %v2523 = vpop.f32.mrf.mxu0
        %v2524 = vpop.f32.mrf.mxu0
        %v2525 = vadd.f32 %v2245, %v2524
        %v2526 = vpop.f32.mrf.mxu0
        %2527 = vmatprep.mubr.bf16.mxu0 %v2216
        %2528 = vmatmul.mubr.bf16.gmra.mxu0 %v2215
        %v2529 = vpop.f32.mrf.mxu0
        %v2530 = vadd.f32 %v2245, %v2529
        %v2531 = vpop.f32.mrf.mxu0
        %v2532 = vpop.f32.mrf.mxu0
        %v2533 = vadd.f32 %v2245, %v2532
        %v2534 = vpop.f32.mrf.mxu0
        %2535 = vmatprep.mubr.bf16.mxu0 %v2218
        %2536 = vmatmul.mubr.bf16.gmra.mxu0 %v2217
        %v2537 = vpop.f32.mrf.mxu0
        %v2538 = vadd.f32 %v2245, %v2537
        %v2539 = vpop.f32.mrf.mxu0
        %v2540 = vpop.f32.mrf.mxu0
        %v2541 = vadd.f32 %v2245, %v2540
        %v2542 = vpop.f32.mrf.mxu0
        %2543 = vmatprep.mubr.bf16.mxu0 %v2220
        %2544 = vmatmul.mubr.bf16.gmra.mxu0 %v2219
        %v2545 = vpop.f32.mrf.mxu0
        %v2546 = vadd.f32 %v2245, %v2545
        %v2547 = vpop.f32.mrf.mxu0
        %v2548 = vpop.f32.mrf.mxu0
        %v2549 = vadd.f32 %v2245, %v2548
        %v2550 = vpop.f32.mrf.mxu0
        %2551 = vmatprep.mubr.bf16.mxu0 %v2222
        %2552 = vmatmul.mubr.bf16.gmra.mxu0 %v2221
        %v2553 = vpop.f32.mrf.mxu0
        %v2554 = vadd.f32 %v2245, %v2553
        %v2555 = vpop.f32.mrf.mxu0
        %v2556 = vpop.f32.mrf.mxu0
        %v2557 = vadd.f32 %v2245, %v2556
        %v2558 = vpop.f32.mrf.mxu0
        %2559 = vmatprep.mubr.bf16.mxu0 %v2224
        %2560 = vmatmul.mubr.bf16.gmra.mxu0 %v2223
        %v2561 = vpop.f32.mrf.mxu0
        %v2562 = vadd.f32 %v2245, %v2561
        %v2563 = vpop.f32.mrf.mxu0
        %v2564 = vpop.f32.mrf.mxu0
        %v2565 = vadd.f32 %v2245, %v2564
        %v2566 = vpop.f32.mrf.mxu0
        %2567 = vmatprep.mubr.bf16.mxu0 %v2226
        %2568 = vmatmul.mubr.bf16.gmra.mxu0 %v2225
        %v2569 = vpop.f32.mrf.mxu0
        %v2570 = vadd.f32 %v2245, %v2569
        %v2571 = vpop.f32.mrf.mxu0
        %v2572 = vpop.f32.mrf.mxu0
        %v2573 = vadd.f32 %v2245, %v2572
        %v2574 = vpop.f32.mrf.mxu0
        %2575 = vmatprep.mubr.bf16.mxu0 %v2228
        %2576 = vmatmul.mubr.bf16.gmra.mxu0 %v2227
        %v2577 = vpop.f32.mrf.mxu0
        %v2578 = vadd.f32 %v2245, %v2577
        %v2579 = vpop.f32.mrf.mxu0
        %v2580 = vpop.f32.mrf.mxu0
        %v2581 = vadd.f32 %v2245, %v2580
        %v2582 = vpop.f32.mrf.mxu0
        %2583 = vmatprep.mubr.bf16.mxu0 %v2230
        %2584 = vmatmul.mubr.bf16.gmra.mxu0 %v2229
        %v2585 = vpop.f32.mrf.mxu0
        %v2586 = vadd.f32 %v2245, %v2585
        %v2587 = vpop.f32.mrf.mxu0
        %v2588 = vpop.f32.mrf.mxu0
        %v2589 = vadd.f32 %v2245, %v2588
        %v2590 = vpop.f32.mrf.mxu0
        %2591 = vmatprep.mubr.bf16.mxu0 %v2232
        %2592 = vmatmul.mubr.bf16.gmra.mxu0 %v2231
        %v2593 = vpop.f32.mrf.mxu0
        %v2594 = vadd.f32 %v2245, %v2593
        %v2595 = vpop.f32.mrf.mxu0
        %v2596 = vpop.f32.mrf.mxu0
        %v2597 = vadd.f32 %v2245, %v2596
        %v2598 = vpop.f32.mrf.mxu0
        %2599 = vmatprep.mubr.bf16.mxu0 %v2234
        %2600 = vmatmul.mubr.bf16.gmra.mxu0 %v2233
        %v2601 = vpop.f32.mrf.mxu0
        %v2602 = vadd.f32 %v2245, %v2601
        %v2603 = vpop.f32.mrf.mxu0
        %v2604 = vpop.f32.mrf.mxu0
        %v2605 = vadd.f32 %v2245, %v2604
        %v2606 = vpop.f32.mrf.mxu0
        %2607 = vmatprep.mubr.bf16.mxu0 %v2236
        %2608 = vmatmul.mubr.bf16.gmra.mxu0 %v2235
        %v2609 = vpop.f32.mrf.mxu0
        %v2610 = vadd.f32 %v2245, %v2609
        %v2611 = vpop.f32.mrf.mxu0
        %v2612 = vpop.f32.mrf.mxu0
        %v2613 = vadd.f32 %v2245, %v2612
        %v2614 = vpop.f32.mrf.mxu0
        %2615 = vmatprep.mubr.bf16.mxu0 %v2238
        %2616 = vmatmul.mubr.bf16.gmra.mxu0 %v2237
        %v2617 = vpop.f32.mrf.mxu0
        %v2618 = vadd.f32 %v2245, %v2617
        %v2619 = vpop.f32.mrf.mxu0
        %v2620 = vpop.f32.mrf.mxu0
        %v2621 = vadd.f32 %v2245, %v2620
        %v2622 = vpop.f32.mrf.mxu0
        %2623 = vmatprep.mubr.bf16.mxu0 %v2240
        %2624 = vmatmul.mubr.bf16.gmra.mxu0 %v2239
        %v2625 = vpop.f32.mrf.mxu0
        %v2626 = vadd.f32 %v2245, %v2625
        %v2627 = vpop.f32.mrf.mxu0
        %v2628 = vpop.f32.mrf.mxu0
        %v2629 = vadd.f32 %v2245, %v2628
        %v2630 = vpop.f32.mrf.mxu0
        %2631 = vdwg.mxu0
        %v2632 = vpack.c.bf16 %v2381, %v2378
        %v2633 = vpack.c.bf16 %v2389, %v2386
        %v2634 = vpack.c.bf16 %v2397, %v2394
        %v2635 = vpack.c.bf16 %v2405, %v2402
        %v2636 = vpack.c.bf16 %v2413, %v2410
        %v2637 = vpack.c.bf16 %v2421, %v2418
        %v2638 = vpack.c.bf16 %v2429, %v2426
        %v2639 = vpack.c.bf16 %v2437, %v2434
        %v2640 = vpack.c.bf16 %v2445, %v2442
        %v2641 = vpack.c.bf16 %v2453, %v2450
        %v2642 = vpack.c.bf16 %v2461, %v2458
        %v2643 = vpack.c.bf16 %v2469, %v2466
        %v2644 = vpack.c.bf16 %v2477, %v2474
        %v2645 = vpack.c.bf16 %v2485, %v2482
        %v2646 = vpack.c.bf16 %v2493, %v2490
        %v2647 = vpack.c.bf16 %v2501, %v2498
        %v2648 = vpack.c.bf16 %v2509, %v2506
        %v2649 = vpack.c.bf16 %v2517, %v2514
        %v2650 = vpack.c.bf16 %v2525, %v2522
        %v2651 = vpack.c.bf16 %v2533, %v2530
        %v2652 = vpack.c.bf16 %v2541, %v2538
        %v2653 = vpack.c.bf16 %v2549, %v2546
        %v2654 = vpack.c.bf16 %v2557, %v2554
        %v2655 = vpack.c.bf16 %v2565, %v2562
        %v2656 = vpack.c.bf16 %v2573, %v2570
        %v2657 = vpack.c.bf16 %v2581, %v2578
        %v2658 = vpack.c.bf16 %v2589, %v2586
        %v2659 = vpack.c.bf16 %v2597, %v2594
        %v2660 = vpack.c.bf16 %v2605, %v2602
        %v2661 = vpack.c.bf16 %v2613, %v2610
        %v2662 = vpack.c.bf16 %v2621, %v2618
        %v2663 = vpack.c.bf16 %v2629, %v2626
        %v2696 = vunpack.c.l.b16 %v2632
        %v2697 = vunpack.c.h.b16 %v2632
        %v2698 = vunpack.c.l.b16 %v2633
        %v2699 = vunpack.c.h.b16 %v2633
        %v2700 = vunpack.c.l.b16 %v2634
        %v2701 = vunpack.c.h.b16 %v2634
        %v2702 = vunpack.c.l.b16 %v2635
        %v2703 = vunpack.c.h.b16 %v2635
        %v2704 = vunpack.c.l.b16 %v2636
        %v2705 = vunpack.c.h.b16 %v2636
        %v2706 = vunpack.c.l.b16 %v2637
        %v2707 = vunpack.c.h.b16 %v2637
        %v2708 = vunpack.c.l.b16 %v2638
        %v2709 = vunpack.c.h.b16 %v2638
        %v2710 = vunpack.c.l.b16 %v2639
        %v2711 = vunpack.c.h.b16 %v2639
        %v2712 = vunpack.c.l.b16 %v2640
        %v2713 = vunpack.c.h.b16 %v2640
        %v2714 = vunpack.c.l.b16 %v2641
        %v2715 = vunpack.c.h.b16 %v2641
        %v2716 = vunpack.c.l.b16 %v2642
        %v2717 = vunpack.c.h.b16 %v2642
        %v2718 = vunpack.c.l.b16 %v2643
        %v2719 = vunpack.c.h.b16 %v2643
        %v2720 = vunpack.c.l.b16 %v2644
        %v2721 = vunpack.c.h.b16 %v2644
        %v2722 = vunpack.c.l.b16 %v2645
        %v2723 = vunpack.c.h.b16 %v2645
        %v2724 = vunpack.c.l.b16 %v2646
        %v2725 = vunpack.c.h.b16 %v2646
        %v2726 = vunpack.c.l.b16 %v2647
        %v2727 = vunpack.c.h.b16 %v2647
        %v2728 = vunpack.c.l.b16 %v2648
        %v2729 = vunpack.c.h.b16 %v2648
        %v2730 = vunpack.c.l.b16 %v2649
        %v2731 = vunpack.c.h.b16 %v2649
        %v2732 = vunpack.c.l.b16 %v2650
        %v2733 = vunpack.c.h.b16 %v2650
        %v2734 = vunpack.c.l.b16 %v2651
        %v2735 = vunpack.c.h.b16 %v2651
        %v2736 = vunpack.c.l.b16 %v2652
        %v2737 = vunpack.c.h.b16 %v2652
        %v2738 = vunpack.c.l.b16 %v2653
        %v2739 = vunpack.c.h.b16 %v2653
        %v2740 = vunpack.c.l.b16 %v2654
        %v2741 = vunpack.c.h.b16 %v2654
        %v2742 = vunpack.c.l.b16 %v2655
        %v2743 = vunpack.c.h.b16 %v2655
        %v2744 = vunpack.c.l.b16 %v2656
        %v2745 = vunpack.c.h.b16 %v2656
        %v2746 = vunpack.c.l.b16 %v2657
        %v2747 = vunpack.c.h.b16 %v2657
        %v2748 = vunpack.c.l.b16 %v2658
        %v2749 = vunpack.c.h.b16 %v2658
        %v2750 = vunpack.c.l.b16 %v2659
        %v2751 = vunpack.c.h.b16 %v2659
        %v2752 = vunpack.c.l.b16 %v2660
        %v2753 = vunpack.c.h.b16 %v2660
        %v2754 = vunpack.c.l.b16 %v2661
        %v2755 = vunpack.c.h.b16 %v2661
        %v2756 = vunpack.c.l.b16 %v2662
        %v2757 = vunpack.c.h.b16 %v2662
        %v2758 = vunpack.c.l.b16 %v2663
        %v2759 = vunpack.c.h.b16 %v2663
        %v2760 = vpack.c.b16 %v2696, %v2696
        %v2761 = vpack.c.b16 %v2697, %v2697
        %v2762 = vpack.c.b16 %v2698, %v2698
        %v2763 = vpack.c.b16 %v2699, %v2699
        %v2764 = vpack.c.b16 %v2700, %v2700
        %v2765 = vpack.c.b16 %v2701, %v2701
        %v2766 = vpack.c.b16 %v2702, %v2702
        %v2767 = vpack.c.b16 %v2703, %v2703
        %v2768 = vpack.c.b16 %v2704, %v2704
        %v2769 = vpack.c.b16 %v2705, %v2705
        %v2770 = vpack.c.b16 %v2706, %v2706
        %v2771 = vpack.c.b16 %v2707, %v2707
        %v2772 = vpack.c.b16 %v2708, %v2708
        %v2773 = vpack.c.b16 %v2709, %v2709
        %v2774 = vpack.c.b16 %v2710, %v2710
        %v2775 = vpack.c.b16 %v2711, %v2711
        %v2776 = vpack.c.b16 %v2712, %v2712
        %v2777 = vpack.c.b16 %v2713, %v2713
        %v2778 = vpack.c.b16 %v2714, %v2714
        %v2779 = vpack.c.b16 %v2715, %v2715
        %v2780 = vpack.c.b16 %v2716, %v2716
        %v2781 = vpack.c.b16 %v2717, %v2717
        %v2782 = vpack.c.b16 %v2718, %v2718
        %v2783 = vpack.c.b16 %v2719, %v2719
        %v2784 = vpack.c.b16 %v2720, %v2720
        %v2785 = vpack.c.b16 %v2721, %v2721
        %v2786 = vpack.c.b16 %v2722, %v2722
        %v2787 = vpack.c.b16 %v2723, %v2723
        %v2788 = vpack.c.b16 %v2724, %v2724
        %v2789 = vpack.c.b16 %v2725, %v2725
        %v2790 = vpack.c.b16 %v2726, %v2726
        %v2791 = vpack.c.b16 %v2727, %v2727
        %v2792 = vpack.c.b16 %v2728, %v2728
        %v2793 = vpack.c.b16 %v2729, %v2729
        %v2794 = vpack.c.b16 %v2730, %v2730
        %v2795 = vpack.c.b16 %v2731, %v2731
        %v2796 = vpack.c.b16 %v2732, %v2732
        %v2797 = vpack.c.b16 %v2733, %v2733
        %v2798 = vpack.c.b16 %v2734, %v2734
        %v2799 = vpack.c.b16 %v2735, %v2735
        %v2800 = vpack.c.b16 %v2736, %v2736
        %v2801 = vpack.c.b16 %v2737, %v2737
        %v2802 = vpack.c.b16 %v2738, %v2738
        %v2803 = vpack.c.b16 %v2739, %v2739
        %v2804 = vpack.c.b16 %v2740, %v2740
        %v2805 = vpack.c.b16 %v2741, %v2741
        %v2806 = vpack.c.b16 %v2742, %v2742
        %v2807 = vpack.c.b16 %v2743, %v2743
        %v2808 = vpack.c.b16 %v2744, %v2744
        %v2809 = vpack.c.b16 %v2745, %v2745
        %v2810 = vpack.c.b16 %v2746, %v2746
        %v2811 = vpack.c.b16 %v2747, %v2747
        %v2812 = vpack.c.b16 %v2748, %v2748
        %v2813 = vpack.c.b16 %v2749, %v2749
        %v2814 = vpack.c.b16 %v2750, %v2750
        %v2815 = vpack.c.b16 %v2751, %v2751
        %v2816 = vpack.c.b16 %v2752, %v2752
        %v2817 = vpack.c.b16 %v2753, %v2753
        %v2818 = vpack.c.b16 %v2754, %v2754
        %v2819 = vpack.c.b16 %v2755, %v2755
        %v2820 = vpack.c.b16 %v2756, %v2756
        %v2821 = vpack.c.b16 %v2757, %v2757
        %v2822 = vpack.c.b16 %v2758, %v2758
        %v2823 = vpack.c.b16 %v2759, %v2759
        %2888 = vst [vmem:[%s271] sm:$0xf] %v2760
        %2889 = vst [vmem:[%s271 + $0x4] sm:$0xf] %v2761
        %2890 = vst [vmem:[%s271 + $0x8] sm:$0xf] %v2762
        %2891 = vst [vmem:[%s271 + $0xc] sm:$0xf] %v2763
        %2892 = vst [vmem:[%s271 + $0x10] sm:$0xf] %v2764
        %2893 = vst [vmem:[%s271 + $0x14] sm:$0xf] %v2765
        %2894 = vst [vmem:[%s271 + $0x18] sm:$0xf] %v2766
        %2895 = vst [vmem:[%s271 + $0x1c] sm:$0xf] %v2767
        %2896 = vst [vmem:[%s271 + $0x20] sm:$0xf] %v2768
        %2897 = vst [vmem:[%s271 + $0x24] sm:$0xf] %v2769
        %2898 = vst [vmem:[%s271 + $0x28] sm:$0xf] %v2770
        %2899 = vst [vmem:[%s271 + $0x2c] sm:$0xf] %v2771
        %2900 = vst [vmem:[%s271 + $0x30] sm:$0xf] %v2772
        %2901 = vst [vmem:[%s271 + $0x34] sm:$0xf] %v2773
        %2902 = vst [vmem:[%s271 + $0x38] sm:$0xf] %v2774
        %2903 = vst [vmem:[%s271 + $0x3c] sm:$0xf] %v2775
        %2904 = vst [vmem:[%s271 + $0x40] sm:$0xf] %v2776
        %2905 = vst [vmem:[%s271 + $0x44] sm:$0xf] %v2777
        %2906 = vst [vmem:[%s271 + $0x48] sm:$0xf] %v2778
        %2907 = vst [vmem:[%s271 + $0x4c] sm:$0xf] %v2779
        %2908 = vst [vmem:[%s271 + $0x50] sm:$0xf] %v2780
        %2909 = vst [vmem:[%s271 + $0x54] sm:$0xf] %v2781
        %2910 = vst [vmem:[%s271 + $0x58] sm:$0xf] %v2782
        %2911 = vst [vmem:[%s271 + $0x5c] sm:$0xf] %v2783
        %2912 = vst [vmem:[%s271 + $0x60] sm:$0xf] %v2784
        %2913 = vst [vmem:[%s271 + $0x64] sm:$0xf] %v2785
        %2914 = vst [vmem:[%s271 + $0x68] sm:$0xf] %v2786
        %2915 = vst [vmem:[%s271 + $0x6c] sm:$0xf] %v2787
        %2916 = vst [vmem:[%s271 + $0x70] sm:$0xf] %v2788
        %2917 = vst [vmem:[%s271 + $0x74] sm:$0xf] %v2789
        %2918 = vst [vmem:[%s271 + $0x78] sm:$0xf] %v2790
        %2919 = vst [vmem:[%s271 + $0x7c] sm:$0xf] %v2791
        %2920 = vst [vmem:[%s271 + $0x80] sm:$0xf] %v2792
        %2921 = vst [vmem:[%s271 + $0x84] sm:$0xf] %v2793
        %2922 = vst [vmem:[%s271 + $0x88] sm:$0xf] %v2794
        %2923 = vst [vmem:[%s271 + $0x8c] sm:$0xf] %v2795
        %2924 = vst [vmem:[%s271 + $0x90] sm:$0xf] %v2796
        %2925 = vst [vmem:[%s271 + $0x94] sm:$0xf] %v2797
        %2926 = vst [vmem:[%s271 + $0x98] sm:$0xf] %v2798
        %2927 = vst [vmem:[%s271 + $0x9c] sm:$0xf] %v2799
        %2928 = vst [vmem:[%s271 + $0xa0] sm:$0xf] %v2800
        %2929 = vst [vmem:[%s271 + $0xa4] sm:$0xf] %v2801
        %2930 = vst [vmem:[%s271 + $0xa8] sm:$0xf] %v2802
        %2931 = vst [vmem:[%s271 + $0xac] sm:$0xf] %v2803
        %2932 = vst [vmem:[%s271 + $0xb0] sm:$0xf] %v2804
        %2933 = vst [vmem:[%s271 + $0xb4] sm:$0xf] %v2805
        %2934 = vst [vmem:[%s271 + $0xb8] sm:$0xf] %v2806
        %2935 = vst [vmem:[%s271 + $0xbc] sm:$0xf] %v2807
        %2936 = vst [vmem:[%s271 + $0xc0] sm:$0xf] %v2808
        %2937 = vst [vmem:[%s271 + $0xc4] sm:$0xf] %v2809
        %2938 = vst [vmem:[%s271 + $0xc8] sm:$0xf] %v2810
        %2939 = vst [vmem:[%s271 + $0xcc] sm:$0xf] %v2811
        %2940 = vst [vmem:[%s271 + $0xd0] sm:$0xf] %v2812
        %2941 = vst [vmem:[%s271 + $0xd4] sm:$0xf] %v2813
        %2942 = vst [vmem:[%s271 + $0xd8] sm:$0xf] %v2814
        %2943 = vst [vmem:[%s271 + $0xdc] sm:$0xf] %v2815
        %2944 = vst [vmem:[%s271 + $0xe0] sm:$0xf] %v2816
        %2945 = vst [vmem:[%s271 + $0xe4] sm:$0xf] %v2817
        %2946 = vst [vmem:[%s271 + $0xe8] sm:$0xf] %v2818
        %2947 = vst [vmem:[%s271 + $0xec] sm:$0xf] %v2819
        %2948 = vst [vmem:[%s271 + $0xf0] sm:$0xf] %v2820
        %2949 = vst [vmem:[%s271 + $0xf4] sm:$0xf] %v2821
        %2950 = vst [vmem:[%s271 + $0xf8] sm:$0xf] %v2822
        %2951 = vst [vmem:[%s271 + $0xfc] sm:$0xf] %v2823
        %s2952 = sand.u32 %s141, 1
        %s2953 = scalar_lea.sflag [#allocation4], %s2952
        %s2954 = sand.u32 %s141, 1
        %s2955 = smul.addr %s2954, 256
        %s2956 = scalar_lea.vmem [#allocation8], %s2955
        // Predicated region
        $region53: #{tpu_custom_call.1} parent=39 // pred_check
          %p2957 = pneg %p151
        $region54: #{tpu_custom_call.1} parent=39 // pred_check_branch
          %2959 = sbr.rel (%p2957) target = $region56
        $region55: #{tpu_custom_call.1} parent=39 // pred_region
          %s2960 = smul.u32 64, %s23
          %s2962 = ssub.s32 4096, 4096
          %2963 = vsyncadd %s2953, %s2962
          %s2964 = smul.addr %s2960, 64
          %s2965 = scalar_lea.hbm %s5, %s2964
          %s2966 = sshll.u32 %s2956, 4
          %s2967 = int_to_ptr.vmem [resolvable:$true] %s2966
          %2972 = dma.vmem_to_hbm [thread:$0]  %s2967, 4096, %s2965, %s2953, 64, 64, 4
        $region56: #{tpu_custom_call.1} parent=39 // pred_fallthru
          _
      $region40: #{tpu_custom_call.1} parent=5 // pred_fallthru
        _
      %p2973 = scmp.le.s32.totalorder 2, %s18
      // Predicated region
      $region57: #{tpu_custom_call.1} parent=5 // pred_check
        %p2974 = pneg %p2973
      $region58: #{tpu_custom_call.1} parent=5 // pred_check_branch
        %2976 = sbr.rel (%p2974) target = $region60
      $region59: #{tpu_custom_call.1} parent=5 // pred_region
        %s2977 = ssub.s32 %s18, 2
        // Predicated region
        $region61: #{tpu_custom_call.1} parent=59 // pred_check
          %p2978 = pneg %p157
        $region62: #{tpu_custom_call.1} parent=59 // pred_check_branch
          %2980 = sbr.rel (%p2978) target = $region64
        $region63: #{tpu_custom_call.1} parent=59 // pred_region
          %s2981 = sand.u32 %s142, 1
          %s2982 = scalar_lea.sflag [#allocation4], %s2981
          %s2983 = sand.u32 %s142, 1
          %s2984 = smul.addr %s2983, 256
          %s2985 = scalar_lea.vmem [#allocation8], %s2984
          %2986 = dma.done %s2982, 4096
        $region64: #{tpu_custom_call.1} parent=59 // pred_fallthru
          _
      $region60: #{tpu_custom_call.1} parent=5 // pred_fallthru
        _
    $region6: #{tpu_custom_call.1} parent=1 // loop_footer
      %s22 = sadd.s32 1, %s18
    $region7: #{tpu_custom_call.1} parent=1 // loop_footer_branch
      %17 = sbr.rel target = $region3
    $region8: #{tpu_custom_call.1} parent=1 // loop_exit
      _
    %2987 = vsyncpa [#allocation3], 1
    %s2988 = scalar_lea.sflag [#allocation3], 1
    %2989 = vsyncpa %s2988, 1
    %2990 = vsyncpa [#allocation6], 1
    %2991 = vsyncpa [#allocation4], 1
    %s2992 = scalar_lea.sflag [#allocation4], 1
    %2993 = vsyncpa %s2992, 1

</llo_original>
